<compile_context>
chip_gen: v6e
topology: v6e:2x2x1
jax: 0.10.0
libtpu: 0.0.40
codegen_flags: <defaults>
</compile_context>

<pallas_src>
import math

import jax
import jax.numpy as jnp
import numpy as np
from jax.experimental import pallas as pl
from jax.experimental.pallas import tpu as pltpu


# ----------------------------- kernel ---------------------------------------


def _attention_classifier_kernel(
    x_ref,        # (Bt, S, D)   block of batch rows
    wqkv_ref,     # (D, 3D)      fused QKV weight [in, out], 1/sqrt(hd) folded into the Q slice
    bqkv_ref,     # (1, 3D)
    mh_ref,       # (D, H)       one-hot head-assignment matrix (lane d -> head d // hd)
    mhT_ref,      # (H, D)       its transpose (precomputed host-side, avoids in-kernel transpose)
    wo_ref,       # (D, D)       out-projection [in, out]
    bo_ref,       # (1, D)
    watt_ref,     # (1, D)       attention_weights Linear(D->1) weight (as a lane vector)
    batt_ref,     # (1,)         scalar pooling bias, in SMEM
    wc_ref,       # (D, Cp)      classifier weight, lane-padded to Cp (multiple of 128)
    bc_ref,       # (1, Cp)
    out_ref,      # (Bt, Cp)
):
    Bt, S, D = x_ref.shape
    H = mh_ref.shape[1]

    x2 = x_ref[...].reshape(Bt * S, D)                                    # (Bt*S, D)

    # ---- one fused, lane-dense QKV projection (scale pre-folded into the Q columns) ----
    qkv = jnp.dot(x2, wqkv_ref[...], preferred_element_type=jnp.float32) + bqkv_ref[...]
    q = qkv[:, 0 * D:1 * D].reshape(Bt, S, D)                             # heads concatenated in lanes
    k = qkv[:, 1 * D:2 * D].reshape(Bt, S, D)
    v = qkv[:, 2 * D:3 * D].reshape(Bt, S, D)

    # ---- per-head scaled dot-product attention, kept lane-dense in D -------------------
    # scores[b,i,j,h] = sum_{d in head h} q[b,i,d] * k[b,j,d]
    # (full lane product, then a (D,H) one-hot matmul groups lanes per head; exact.)
    # NOTE: the (Bt, S, S, D) product is B*S^2*D floats — trivial here; tile S if it grows.
    prod = (q[:, :, None, :] * k[:, None, :, :]).reshape(Bt * S * S, D)
    s = jnp.dot(prod, mh_ref[...],
                preferred_element_type=jnp.float32).reshape(Bt, S, S, H)  # (Bt, Sq, Sk, H)
    s = s - jnp.max(s, axis=2, keepdims=True)
    e = jnp.exp(s)
    p = e / jnp.sum(e, axis=2, keepdims=True)                             # softmax over keys

    # Expand each head's weights back over that head's hd lanes and contract the key axis
    # on the VPU: o[b,i,d] = sum_j p[b,i,j,head(d)] * v[b,j,d]  (== concatenated head outputs).
    p_l = jnp.dot(p.reshape(Bt * S * S, H), mhT_ref[...],
                  preferred_element_type=jnp.float32).reshape(Bt, S, S, D)
    o = jnp.sum(p_l * v[:, None, :, :], axis=2)                           # (Bt, S, D)

    # ---- out-projection: one (Bt*S, D) @ (D, D) matmul ---------------------------------
    feat = (jnp.dot(o.reshape(Bt * S, D), wo_ref[...],
                    preferred_element_type=jnp.float32) + bo_ref[...]).reshape(Bt, S, D)

    # ---- attention pooling: Linear(D->1) as a lane reduction, softmax over seq, weighted sum
    sc = jnp.sum(feat * watt_ref[...], axis=-1, keepdims=True) + batt_ref[0]  # (Bt, S, 1)
    sc = sc - jnp.max(sc, axis=1, keepdims=True)
    ew = jnp.exp(sc)
    aw = ew / jnp.sum(ew, axis=1, keepdims=True)                           # softmax over seq
    pooled = jnp.sum(feat * aw, axis=1)                                    # (Bt, D)

    # dropout is identity in eval mode.

    # ---- classifier (lane-dense, padded to Cp lanes) ------------------------------------
    out_ref[...] = jnp.dot(pooled, wc_ref[...],
                           preferred_element_type=jnp.float32) + bc_ref[...]  # (Bt, Cp)


# ----------------------------- wrapper --------------------------------------


def _prep_weights(params, D, H, C):
    """One-time host-side re-layout of PyTorch-style [out, in] weights into kernel layout."""
    hd = D // H
    scale = 1.0 / math.sqrt(hd)
    Cp = ((C + 127) // 128) * 128

    w_qkv = params["w_qkv"]                     # (3D, D)  [out, in]
    b_qkv = params["b_qkv"].reshape(3 * D)

    # Fuse into one (D, 3D) [in, out] matrix; fold the 1/sqrt(hd) q-scale into its Q columns
    # (PyTorch scales q AFTER the in-projection incl. bias, so the bias slice is scaled too).
    scale_vec = jnp.concatenate([jnp.full((D,), scale, jnp.float32),
                                 jnp.ones((2 * D,), jnp.float32)])
    wqkv = w_qkv.T * scale_vec[None, :]         # (D, 3D)
    bqkv = (b_qkv * scale_vec).reshape(1, 3 * D)

    # One-hot head-assignment matrix: mh[d, h] = 1 iff lane d belongs to head h.
    head_of_lane = jnp.arange(D, dtype=jnp.int32) // hd
    mh = (head_of_lane[:, None] == jnp.arange(H, dtype=jnp.int32)[None, :]).astype(jnp.float32)
    mhT = mh.T                                  # (H, D)

    wo = params["w_out"].T                      # (D, D) [in, out]
    bo = params["b_out"].reshape(1, D)
    watt = params["w_att"].reshape(1, D)
    batt = params["b_att"].reshape(1)           # scalar -> SMEM
    wc = jnp.zeros((D, Cp), jnp.float32).at[:, :C].set(params["w_cls"].T)
    bc = jnp.zeros((1, Cp), jnp.float32).at[:, :C].set(params["b_cls"].reshape(1, C))
    return (wqkv, bqkv, mh, mhT, wo, bo, watt, batt, wc, bc), Cp


def attention_classifier_forward(features, params, num_heads, block_b=None):
    """features: [B, S, D] float32 -> logits [B, C]."""
    B, S, D = features.shape
    C = params["w_cls"].shape[0]
    assert D % num_heads == 0
    # TODO(synk): S == 1 / 2-D-input branch (skip self-attention) not implemented.
    assert S > 1

    if block_b is None:
        # Single grid step by default: at small shapes the kernel is per-step-overhead bound
        # and v5e/v6e have a single TensorCore.  For large B pass block_b (a multiple of 8).
        block_b = B
    assert B % block_b == 0
    assert block_b == B or block_b % 8 == 0, "keep the (block_b, Cp) output block sublane-dense"

    (wqkv, bqkv, mh, mhT, wo, bo, watt, batt, wc, bc), Cp = _prep_weights(
        params, D, num_heads, C)

    def const2(a):   # grid-invariant 2-D operand, full-array block (never replicated per batch)
        return pl.BlockSpec(a.shape, lambda b: (0, 0))

    logits = pl.pallas_call(
        _attention_classifier_kernel,
        out_shape=jax.ShapeDtypeStruct((B, Cp), jnp.float32),
        grid=(B // block_b,),
        in_specs=[
            pl.BlockSpec((block_b, S, D), lambda b: (b, 0, 0)),   # feature rows
            const2(wqkv), const2(bqkv),
            const2(mh), const2(mhT),
            const2(wo), const2(bo),
            const2(watt),
            pl.BlockSpec(memory_space=pltpu.MemorySpace.SMEM),    # scalar pooling bias
            const2(wc), const2(bc),
        ],
        out_specs=pl.BlockSpec((block_b, Cp), lambda b: (b, 0)),
        compiler_params=pltpu.CompilerParams(dimension_semantics=("parallel",)),
    )(features, wqkv, bqkv, mh, mhT, wo, bo, watt, batt, wc, bc)

    return logits[:, :C]


# ------------------------- parameter init (deterministic) -------------------


def _xavier_uniform(key, shape):
    fan_out, fan_in = shape
    bound = math.sqrt(6.0 / (fan_in + fan_out))
    return jax.random.uniform(key, shape, jnp.float32, -bound, bound)


def init_params(key, input_dim, num_classes):
    D, C = input_dim, num_classes
    k1, k2, k3, k4 = jax.random.split(key, 4)
    bound = 1.0 / math.sqrt(D)
    return {
        "w_qkv": _xavier_uniform(k1, (3 * D, D)),
        "b_qkv": jnp.zeros((1, 3 * D), jnp.float32),
        "w_out": jax.random.uniform(k2, (D, D), jnp.float32, -bound, bound),
        "b_out": jnp.zeros((1, D), jnp.float32),
        "w_att": _xavier_uniform(k3, (1, D)),
        "b_att": jnp.zeros((1, 1), jnp.float32),
        "w_cls": _xavier_uniform(k4, (C, D)),
        "b_cls": jnp.zeros((1, C), jnp.float32),
    }


# ------------------------- pure-JAX reference -------------------------------


def reference_forward(x, p, H):
    B, S, D = x.shape
    hd = D // H
    qkv = jnp.einsum("bsd,ed->bse", x, p["w_qkv"]) + p["b_qkv"][0]
    q, k, v = qkv[..., :D], qkv[..., D:2 * D], qkv[..., 2 * D:]
    q = q.reshape(B, S, H, hd).transpose(0, 2, 1, 3) / math.sqrt(hd)
    k = k.reshape(B, S, H, hd).transpose(0, 2, 1, 3)
    v = v.reshape(B, S, H, hd).transpose(0, 2, 1, 3)
    s = jnp.einsum("bhqe,bhke->bhqk", q, k)
    pmat = jax.nn.softmax(s, axis=-1)
    attn = jnp.einsum("bhqk,bhke->bhqe", pmat, v).transpose(0, 2, 1, 3).reshape(B, S, D)
    feat = jnp.einsum("bsd,ed->bse", attn, p["w_out"]) + p["b_out"][0]
    scores = jnp.einsum("bsd,od->bso", feat, p["w_att"]) + p["b_att"][0]
    aw = jax.nn.softmax(scores, axis=1)
    pooled = jnp.sum(feat * aw, axis=1)
    return jnp.einsum("bd,cd->bc", pooled, p["w_cls"]) + p["b_cls"][0]


if __name__ == "__main__":
    B, S, D = 2, 8, 32        # batch, seq_len, input_dim
    H = 8                     # num_heads
    C = 10                    # num_classes

    key = jax.random.PRNGKey(0)
    k_x, k_p = jax.random.split(key)
    features = jax.random.normal(k_x, (B, S, D), jnp.float32)
    params = init_params(k_p, D, C)

    logits = attention_classifier_forward(features, params, H)
    logits = jax.block_until_ready(logits)

    ref = reference_forward(features, params, H)
    np.testing.assert_allclose(np.asarray(logits), np.asarray(ref), rtol=1e-4, atol=1e-5)
    assert logits.shape == (B, C)
    print("KERNEL_OK")
</pallas_src>

<mosaic_0001>
module attributes {stable_mosaic.version = 11 : i64} {
  func.func @_attention_classifier_kernel(%arg0: i32, %arg1: memref<2x8x32xf32, #tpu.memory_space<vmem>>, %arg2: memref<32x96xf32, #tpu.memory_space<vmem>>, %arg3: memref<1x96xf32, #tpu.memory_space<vmem>>, %arg4: memref<32x8xf32, #tpu.memory_space<vmem>>, %arg5: memref<8x32xf32, #tpu.memory_space<vmem>>, %arg6: memref<32x32xf32, #tpu.memory_space<vmem>>, %arg7: memref<1x32xf32, #tpu.memory_space<vmem>>, %arg8: memref<1x32xf32, #tpu.memory_space<vmem>>, %arg9: memref<1xf32, #tpu.memory_space<smem>>, %arg10: memref<32x128xf32, #tpu.memory_space<vmem>>, %arg11: memref<1x128xf32, #tpu.memory_space<vmem>>, %arg12: memref<2x128xf32, #tpu.memory_space<vmem>>) attributes {dimension_semantics = [#tpu.dimension_semantics<parallel>], iteration_bounds = array<i64: 1>, scalar_prefetch = 0 : i64, scratch_operands = 0 : i64, tpu.core_type = #tpu.core_type<tc>, window_params = [{transform_indices = @transform_0, window_bounds = array<i64: 2, 8, 32>}, {pipeline_mode = #tpu.pipeline_mode<synchronous>, transform_indices = @transform_1, window_bounds = array<i64: 32, 96>}, {pipeline_mode = #tpu.pipeline_mode<synchronous>, transform_indices = @transform_2, window_bounds = array<i64: 1, 96>}, {pipeline_mode = #tpu.pipeline_mode<synchronous>, transform_indices = @transform_3, window_bounds = array<i64: 32, 8>}, {pipeline_mode = #tpu.pipeline_mode<synchronous>, transform_indices = @transform_4, window_bounds = array<i64: 8, 32>}, {pipeline_mode = #tpu.pipeline_mode<synchronous>, transform_indices = @transform_5, window_bounds = array<i64: 32, 32>}, {pipeline_mode = #tpu.pipeline_mode<synchronous>, transform_indices = @transform_6, window_bounds = array<i64: 1, 32>}, {pipeline_mode = #tpu.pipeline_mode<synchronous>, transform_indices = @transform_7, window_bounds = array<i64: 1, 32>}, {transform_indices = @transform_8, window_bounds = array<i64: 1>}, {pipeline_mode = #tpu.pipeline_mode<synchronous>, transform_indices = @transform_9, window_bounds = array<i64: 32, 128>}, {pipeline_mode = #tpu.pipeline_mode<synchronous>, transform_indices = @transform_10, window_bounds = array<i64: 1, 128>}, {transform_indices = @transform_11, window_bounds = array<i64: 2, 128>}]} {
    %c0 = arith.constant 0 : index
    %c0_0 = arith.constant 0 : index
    %c0_1 = arith.constant 0 : index
    %0 = vector.load %arg1[%c0, %c0_0, %c0_1] : memref<2x8x32xf32, #tpu.memory_space<vmem>>, vector<2x8x32xf32>
    %1 = vector.shape_cast %0 : vector<2x8x32xf32> to vector<16x32xf32>
    %c0_2 = arith.constant 0 : index
    %c0_3 = arith.constant 0 : index
    %2 = vector.load %arg2[%c0_2, %c0_3] : memref<32x96xf32, #tpu.memory_space<vmem>>, vector<32x96xf32>
    %cst = arith.constant dense<0.000000e+00> : vector<16x96xf32>
    %3 = tpu.matmul %1, %2, %cst {dimension_numbers = #tpu.dot_dimension_numbers<[1], [0], [0], [1], [0, 0, 1, 1], [], []>} : vector<16x32xf32>, vector<32x96xf32>, vector<16x96xf32> -> vector<16x96xf32>
    %c0_4 = arith.constant 0 : index
    %c0_5 = arith.constant 0 : index
    %4 = vector.load %arg3[%c0_4, %c0_5] : memref<1x96xf32, #tpu.memory_space<vmem>>, vector<1x96xf32>
    %5 = vector.broadcast %4 : vector<1x96xf32> to vector<16x96xf32>
    %6 = arith.addf %3, %5 : vector<16x96xf32>
    %7 = vector.extract_strided_slice %6 {offsets = [0, 0], sizes = [16, 32], strides = [1, 1]} : vector<16x96xf32> to vector<16x32xf32>
    %8 = vector.shape_cast %7 : vector<16x32xf32> to vector<2x8x32xf32>
    %9 = vector.extract_strided_slice %6 {offsets = [0, 32], sizes = [16, 32], strides = [1, 1]} : vector<16x96xf32> to vector<16x32xf32>
    %10 = vector.shape_cast %9 : vector<16x32xf32> to vector<2x8x32xf32>
    %11 = vector.extract_strided_slice %6 {offsets = [0, 64], sizes = [16, 32], strides = [1, 1]} : vector<16x96xf32> to vector<16x32xf32>
    %12 = vector.shape_cast %11 : vector<16x32xf32> to vector<2x8x32xf32>
    %13 = vector.shape_cast %8 : vector<2x8x32xf32> to vector<2x8x1x32xf32>
    %14 = vector.shape_cast %10 : vector<2x8x32xf32> to vector<2x1x8x32xf32>
    %15 = vector.broadcast %13 : vector<2x8x1x32xf32> to vector<2x8x8x32xf32>
    %16 = vector.broadcast %14 : vector<2x1x8x32xf32> to vector<2x8x8x32xf32>
    %17 = arith.mulf %15, %16 : vector<2x8x8x32xf32>
    %18 = vector.shape_cast %17 : vector<2x8x8x32xf32> to vector<128x32xf32>
    %c0_6 = arith.constant 0 : index
    %c0_7 = arith.constant 0 : index
    %19 = vector.load %arg4[%c0_6, %c0_7] : memref<32x8xf32, #tpu.memory_space<vmem>>, vector<32x8xf32>
    %cst_8 = arith.constant dense<0.000000e+00> : vector<128x8xf32>
    %20 = tpu.matmul %18, %19, %cst_8 {dimension_numbers = #tpu.dot_dimension_numbers<[1], [0], [0], [1], [0, 0, 1, 1], [], []>} : vector<128x32xf32>, vector<32x8xf32>, vector<128x8xf32> -> vector<128x8xf32>
    %21 = vector.shape_cast %20 : vector<128x8xf32> to vector<2x8x8x8xf32>
    %cst_9 = arith.constant dense<0xFF800000> : vector<2x8x8xf32>
    %22 = vector.multi_reduction <maximumf>, %21, %cst_9 [2] : vector<2x8x8x8xf32> to vector<2x8x8xf32>
    %23 = vector.shape_cast %22 : vector<2x8x8xf32> to vector<2x8x1x8xf32>
    %24 = vector.broadcast %23 : vector<2x8x1x8xf32> to vector<2x8x8x8xf32>
    %25 = arith.subf %21, %24 : vector<2x8x8x8xf32>
    %26 = math.exp %25 : vector<2x8x8x8xf32>
    %cst_10 = arith.constant dense<0.000000e+00> : vector<2x8x8xf32>
    %27 = vector.multi_reduction <add>, %26, %cst_10 [2] : vector<2x8x8x8xf32> to vector<2x8x8xf32>
    %28 = vector.shape_cast %27 : vector<2x8x8xf32> to vector<2x8x1x8xf32>
    %29 = vector.broadcast %28 : vector<2x8x1x8xf32> to vector<2x8x8x8xf32>
    %30 = arith.divf %26, %29 : vector<2x8x8x8xf32>
    %31 = vector.shape_cast %30 : vector<2x8x8x8xf32> to vector<128x8xf32>
    %c0_11 = arith.constant 0 : index
    %c0_12 = arith.constant 0 : index
    %32 = vector.load %arg5[%c0_11, %c0_12] : memref<8x32xf32, #tpu.memory_space<vmem>>, vector<8x32xf32>
    %cst_13 = arith.constant dense<0.000000e+00> : vector<128x32xf32>
    %33 = tpu.matmul %31, %32, %cst_13 {dimension_numbers = #tpu.dot_dimension_numbers<[1], [0], [0], [1], [0, 0, 1, 1], [], []>} : vector<128x8xf32>, vector<8x32xf32>, vector<128x32xf32> -> vector<128x32xf32>
    %34 = vector.shape_cast %33 : vector<128x32xf32> to vector<2x8x8x32xf32>
    %35 = vector.shape_cast %12 : vector<2x8x32xf32> to vector<2x1x8x32xf32>
    %36 = vector.broadcast %35 : vector<2x1x8x32xf32> to vector<2x8x8x32xf32>
    %37 = arith.mulf %34, %36 : vector<2x8x8x32xf32>
    %cst_14 = arith.constant dense<0.000000e+00> : vector<2x8x32xf32>
    %38 = vector.multi_reduction <add>, %37, %cst_14 [2] : vector<2x8x8x32xf32> to vector<2x8x32xf32>
    %39 = vector.shape_cast %38 : vector<2x8x32xf32> to vector<16x32xf32>
    %c0_15 = arith.constant 0 : index
    %c0_16 = arith.constant 0 : index
    %40 = vector.load %arg6[%c0_15, %c0_16] : memref<32x32xf32, #tpu.memory_space<vmem>>, vector<32x32xf32>
    %cst_17 = arith.constant dense<0.000000e+00> : vector<16x32xf32>
    %41 = tpu.matmul %39, %40, %cst_17 {dimension_numbers = #tpu.dot_dimension_numbers<[1], [0], [0], [1], [0, 0, 1, 1], [], []>} : vector<16x32xf32>, vector<32x32xf32>, vector<16x32xf32> -> vector<16x32xf32>
    %c0_18 = arith.constant 0 : index
    %c0_19 = arith.constant 0 : index
    %42 = vector.load %arg7[%c0_18, %c0_19] : memref<1x32xf32, #tpu.memory_space<vmem>>, vector<1x32xf32>
    %43 = vector.broadcast %42 : vector<1x32xf32> to vector<16x32xf32>
    %44 = arith.addf %41, %43 : vector<16x32xf32>
    %45 = vector.shape_cast %44 : vector<16x32xf32> to vector<2x8x32xf32>
    %c0_20 = arith.constant 0 : index
    %c0_21 = arith.constant 0 : index
    %46 = vector.load %arg8[%c0_20, %c0_21] : memref<1x32xf32, #tpu.memory_space<vmem>>, vector<1x32xf32>
    %47 = vector.shape_cast %46 : vector<1x32xf32> to vector<1x1x32xf32>
    %48 = vector.broadcast %47 : vector<1x1x32xf32> to vector<2x8x32xf32>
    %49 = arith.mulf %45, %48 : vector<2x8x32xf32>
    %cst_22 = arith.constant dense<0.000000e+00> : vector<2x8xf32>
    %50 = vector.multi_reduction <add>, %49, %cst_22 [2] : vector<2x8x32xf32> to vector<2x8xf32>
    %51 = vector.shape_cast %50 : vector<2x8xf32> to vector<2x8x1xf32>
    %c0_23 = arith.constant 0 : index
    %52 = memref.load %arg9[%c0_23] : memref<1xf32, #tpu.memory_space<smem>>
    %53 = vector.broadcast %52 : f32 to vector<2x8x1xf32>
    %54 = arith.addf %51, %53 : vector<2x8x1xf32>
    %cst_24 = arith.constant dense<0xFF800000> : vector<2x1xf32>
    %55 = vector.multi_reduction <maximumf>, %54, %cst_24 [1] : vector<2x8x1xf32> to vector<2x1xf32>
    %56 = vector.shape_cast %55 : vector<2x1xf32> to vector<2x1x1xf32>
    %57 = vector.broadcast %56 : vector<2x1x1xf32> to vector<2x8x1xf32>
    %58 = arith.subf %54, %57 : vector<2x8x1xf32>
    %59 = math.exp %58 : vector<2x8x1xf32>
    %cst_25 = arith.constant dense<0.000000e+00> : vector<2x1xf32>
    %60 = vector.multi_reduction <add>, %59, %cst_25 [1] : vector<2x8x1xf32> to vector<2x1xf32>
    %61 = vector.shape_cast %60 : vector<2x1xf32> to vector<2x1x1xf32>
    %62 = vector.broadcast %61 : vector<2x1x1xf32> to vector<2x8x1xf32>
    %63 = arith.divf %59, %62 : vector<2x8x1xf32>
    %64 = vector.broadcast %63 : vector<2x8x1xf32> to vector<2x8x32xf32>
    %65 = arith.mulf %45, %64 : vector<2x8x32xf32>
    %cst_26 = arith.constant dense<0.000000e+00> : vector<2x32xf32>
    %66 = vector.multi_reduction <add>, %65, %cst_26 [1] : vector<2x8x32xf32> to vector<2x32xf32>
    %c0_27 = arith.constant 0 : index
    %c0_28 = arith.constant 0 : index
    %67 = vector.load %arg10[%c0_27, %c0_28] : memref<32x128xf32, #tpu.memory_space<vmem>>, vector<32x128xf32>
    %cst_29 = arith.constant dense<0.000000e+00> : vector<2x128xf32>
    %68 = tpu.matmul %66, %67, %cst_29 {dimension_numbers = #tpu.dot_dimension_numbers<[1], [0], [0], [1], [0, 0, 1, 1], [], []>} : vector<2x32xf32>, vector<32x128xf32>, vector<2x128xf32> -> vector<2x128xf32>
    %c0_30 = arith.constant 0 : index
    %c0_31 = arith.constant 0 : index
    %69 = vector.load %arg11[%c0_30, %c0_31] : memref<1x128xf32, #tpu.memory_space<vmem>>, vector<1x128xf32>
    %70 = vector.broadcast %69 : vector<1x128xf32> to vector<2x128xf32>
    %71 = arith.addf %68, %70 : vector<2x128xf32>
    %c0_32 = arith.constant 0 : index
    %c0_33 = arith.constant 0 : index
    %72 = vector.load %arg12[%c0_32, %c0_33] : memref<2x128xf32, #tpu.memory_space<vmem>>, vector<2x128xf32>
    tpu.vector_store %arg12[%c0_32, %c0_33], %71 {strides = array<i32>} : memref<2x128xf32, #tpu.memory_space<vmem>>, vector<2x128xf32>,
    return
  }
  func.func @transform_0(%arg0: i32) -> (i32, i32, i32) {
    %c0_i32 = arith.constant 0 : i32
    %c0_i32_0 = arith.constant 0 : i32
    %c0_i32_1 = arith.constant 0 : i32
    return %arg0, %c0_i32, %c0_i32_0 : i32, i32, i32
  }
  func.func @transform_1(%arg0: i32) -> (i32, i32) {
    %c0_i32 = arith.constant 0 : i32
    %c0_i32_0 = arith.constant 0 : i32
    %c0_i32_1 = arith.constant 0 : i32
    return %c0_i32, %c0_i32_0 : i32, i32
  }
  func.func @transform_2(%arg0: i32) -> (i32, i32) {
    %c0_i32 = arith.constant 0 : i32
    %c0_i32_0 = arith.constant 0 : i32
    %c0_i32_1 = arith.constant 0 : i32
    return %c0_i32, %c0_i32_0 : i32, i32
  }
  func.func @transform_3(%arg0: i32) -> (i32, i32) {
    %c0_i32 = arith.constant 0 : i32
    %c0_i32_0 = arith.constant 0 : i32
    %c0_i32_1 = arith.constant 0 : i32
    return %c0_i32, %c0_i32_0 : i32, i32
  }
  func.func @transform_4(%arg0: i32) -> (i32, i32) {
    %c0_i32 = arith.constant 0 : i32
    %c0_i32_0 = arith.constant 0 : i32
    %c0_i32_1 = arith.constant 0 : i32
    return %c0_i32, %c0_i32_0 : i32, i32
  }
  func.func @transform_5(%arg0: i32) -> (i32, i32) {
    %c0_i32 = arith.constant 0 : i32
    %c0_i32_0 = arith.constant 0 : i32
    %c0_i32_1 = arith.constant 0 : i32
    return %c0_i32, %c0_i32_0 : i32, i32
  }
  func.func @transform_6(%arg0: i32) -> (i32, i32) {
    %c0_i32 = arith.constant 0 : i32
    %c0_i32_0 = arith.constant 0 : i32
    %c0_i32_1 = arith.constant 0 : i32
    return %c0_i32, %c0_i32_0 : i32, i32
  }
  func.func @transform_7(%arg0: i32) -> (i32, i32) {
    %c0_i32 = arith.constant 0 : i32
    %c0_i32_0 = arith.constant 0 : i32
    %c0_i32_1 = arith.constant 0 : i32
    return %c0_i32, %c0_i32_0 : i32, i32
  }
  func.func @transform_8(%arg0: i32) -> i32 {
    %c0_i32 = arith.constant 0 : i32
    %c0_i32_0 = arith.constant 0 : i32
    return %c0_i32 : i32
  }
  func.func @transform_9(%arg0: i32) -> (i32, i32) {
    %c0_i32 = arith.constant 0 : i32
    %c0_i32_0 = arith.constant 0 : i32
    %c0_i32_1 = arith.constant 0 : i32
    return %c0_i32, %c0_i32_0 : i32, i32
  }
  func.func @transform_10(%arg0: i32) -> (i32, i32) {
    %c0_i32 = arith.constant 0 : i32
    %c0_i32_0 = arith.constant 0 : i32
    %c0_i32_1 = arith.constant 0 : i32
    return %c0_i32, %c0_i32_0 : i32, i32
  }
  func.func @transform_11(%arg0: i32) -> (i32, i32) {
    %c0_i32 = arith.constant 0 : i32
    %c0_i32_0 = arith.constant 0 : i32
    return %arg0, %c0_i32 : i32, i32
  }
}

</mosaic_0001>

<llo_original>
// kernel: tpu_custom_call.1
$region0: #{tpu_custom_call.1}
  #allocation0 [shape = 'u32[]', space=smem, size = 0x4, offset = 0x4, fixed_abs, tag = 'smem constant byte address 0x4 - core index']
  #allocation1 [shape = 'u32[144,128]{1,0:T(1,128)}', space=vmem, size = 0x12000, scoped, tag = 'internal scratch']
  #allocation2 [shape = 'f32[1]{0:T(128)S(6)}', space=smem, size = 0x200, scoped, tag = 'scoped memory for tpu_custom_call.1']
  %s0 = inlined_call_operand.hbm [shape: f32[2,8,32], index: 0, kind: input, shape index: {}]
  %s1 = inlined_call_operand.vmem [shape: f32[32,96], index: 1, kind: input, shape index: {}]
  %s2 = inlined_call_operand.vmem [shape: f32[1,96], index: 2, kind: input, shape index: {}]
  %s3 = inlined_call_operand.vmem [shape: f32[32,8], index: 3, kind: input, shape index: {}]
  %s4 = inlined_call_operand.vmem [shape: f32[8,32], index: 4, kind: input, shape index: {}]
  %s5 = inlined_call_operand.hbm [shape: f32[32,32], index: 5, kind: input, shape index: {}]
  %s6 = inlined_call_operand.vmem [shape: f32[1,32], index: 6, kind: input, shape index: {}]
  %s7 = inlined_call_operand.vmem [shape: f32[1,32], index: 7, kind: input, shape index: {}]
  %s8 = inlined_call_operand.<no memory space> [shape: f32[1], index: 8, kind: input, shape index: {}]
  %s9 = inlined_call_operand.hbm [shape: f32[32,128], index: 9, kind: input, shape index: {}]
  %s10 = inlined_call_operand.vmem [shape: f32[1,128], index: 10, kind: input, shape index: {}]
  %s11 = inlined_call_operand.hbm [shape: f32[2,128], index: 11, kind: output, shape index: {}]
  %s12 = sld [smem:[#allocation0]]
  $region66: #{tpu_custom_call.1} parent=0
    _
  %s14 = ssub.s32 1, %s12
  %s15 = scalar_select 0, %s14, %s12
  %16 = sst [smem:[#allocation2]] %s8
  $region1: #{tpu_custom_call.1} parent=0
    #allocation3 [shape = 'u8[8192]{0}', space=vmem, size = 0x2000, scoped, tag = 'input window, operand 0, single buffered']
    #allocation4 [shape = 's32[1]{0}', space=sflag, size = 0x4, scoped, tag = 'scoped memory for tpu_custom_call.1']
    #allocation5 [shape = 's32[1]{0}', space=sflag, size = 0x4, scoped, tag = 'scoped memory for tpu_custom_call.1']
    #allocation6 [shape = 'u8[16384]{0}', space=vmem, size = 0x4000, scoped, tag = 'input window, operand 5, single buffered']
    #allocation7 [shape = 's32[1]{0}', space=sflag, size = 0x4, scoped, tag = 'scoped memory for tpu_custom_call.1']
    #allocation8 [shape = 'u8[16384]{0}', space=vmem, size = 0x4000, scoped, tag = 'input window, operand 9, single buffered']
    #allocation9 [shape = 'u8[1024]{0}', space=vmem, size = 0x400, scoped, tag = 'output window, operand 0, single buffered']
    %17 = vsyncpa [#allocation4], 0
    %18 = vsyncpa [#allocation7], 0
    %19 = vsyncpa [#allocation5], 0
    // Predicated region
    $region2: #{tpu_custom_call.1} parent=1 // pred_check
      _
    $region3: #{tpu_custom_call.1} parent=1 // pred_check_branch
      %21 = sbr.rel (0) target = $region5
    $region4: #{tpu_custom_call.1} parent=1 // pred_region
      %s23 = ssub.s32 256, 256
      %24 = vsyncadd [#allocation4], %s23
      %s25 = sshll.u32 [#allocation3], 4
      %s26 = int_to_ptr.vmem [resolvable:$true] %s25
      %31 = dma.hbm_to_vmem [thread:$0]  %s0, 256, %s26, [#allocation4], 128, 128, 8
    $region5: #{tpu_custom_call.1} parent=1 // pred_fallthru
      _
    // Predicated region
    $region6: #{tpu_custom_call.1} parent=1 // pred_check
      _
    $region7: #{tpu_custom_call.1} parent=1 // pred_check_branch
      %33 = sbr.rel (0) target = $region9
    $region8: #{tpu_custom_call.1} parent=1 // pred_region
      _
    $region9: #{tpu_custom_call.1} parent=1 // pred_fallthru
      _
    // Predicated region
    $region10: #{tpu_custom_call.1} parent=1 // pred_check
      _
    $region11: #{tpu_custom_call.1} parent=1 // pred_check_branch
      %35 = sbr.rel (0) target = $region13
    $region12: #{tpu_custom_call.1} parent=1 // pred_region
      _
    $region13: #{tpu_custom_call.1} parent=1 // pred_fallthru
      _
    // Predicated region
    $region14: #{tpu_custom_call.1} parent=1 // pred_check
      _
    $region15: #{tpu_custom_call.1} parent=1 // pred_check_branch
      %37 = sbr.rel (0) target = $region17
    $region16: #{tpu_custom_call.1} parent=1 // pred_region
      _
    $region17: #{tpu_custom_call.1} parent=1 // pred_fallthru
      _
    // Predicated region
    $region18: #{tpu_custom_call.1} parent=1 // pred_check
      _
    $region19: #{tpu_custom_call.1} parent=1 // pred_check_branch
      %39 = sbr.rel (0) target = $region21
    $region20: #{tpu_custom_call.1} parent=1 // pred_region
      _
    $region21: #{tpu_custom_call.1} parent=1 // pred_fallthru
      _
    // Predicated region
    $region22: #{tpu_custom_call.1} parent=1 // pred_check
      _
    $region23: #{tpu_custom_call.1} parent=1 // pred_check_branch
      %41 = sbr.rel (0) target = $region25
    $region24: #{tpu_custom_call.1} parent=1 // pred_region
      %s43 = ssub.s32 512, 512
      %44 = vsyncadd [#allocation7], %s43
      %s45 = sshll.u32 [#allocation6], 4
      %s46 = int_to_ptr.vmem [resolvable:$true] %s45
      %51 = dma.hbm_to_vmem [thread:$0]  %s5, 512, %s46, [#allocation7], 128, 128, 8
    $region25: #{tpu_custom_call.1} parent=1 // pred_fallthru
      _
    // Predicated region
    $region26: #{tpu_custom_call.1} parent=1 // pred_check
      _
    $region27: #{tpu_custom_call.1} parent=1 // pred_check_branch
      %53 = sbr.rel (0) target = $region29
    $region28: #{tpu_custom_call.1} parent=1 // pred_region
      _
    $region29: #{tpu_custom_call.1} parent=1 // pred_fallthru
      _
    // Predicated region
    $region30: #{tpu_custom_call.1} parent=1 // pred_check
      _
    $region31: #{tpu_custom_call.1} parent=1 // pred_check_branch
      %55 = sbr.rel (0) target = $region33
    $region32: #{tpu_custom_call.1} parent=1 // pred_region
      _
    $region33: #{tpu_custom_call.1} parent=1 // pred_fallthru
      _
    // Predicated region
    $region34: #{tpu_custom_call.1} parent=1 // pred_check
      _
    $region35: #{tpu_custom_call.1} parent=1 // pred_check_branch
      %57 = sbr.rel (0) target = $region37
    $region36: #{tpu_custom_call.1} parent=1 // pred_region
      _
    $region37: #{tpu_custom_call.1} parent=1 // pred_fallthru
      _
    // Predicated region
    $region38: #{tpu_custom_call.1} parent=1 // pred_check
      _
    $region39: #{tpu_custom_call.1} parent=1 // pred_check_branch
      %59 = sbr.rel (0) target = $region41
    $region40: #{tpu_custom_call.1} parent=1 // pred_region
      %s61 = ssub.s32 512, 512
      %62 = vsyncadd [#allocation7], %s61
      %s63 = sshll.u32 [#allocation8], 4
      %s64 = int_to_ptr.vmem [resolvable:$true] %s63
      %69 = dma.hbm_to_vmem [thread:$0]  %s9, 512, %s64, [#allocation7], 128, 128, 8
    $region41: #{tpu_custom_call.1} parent=1 // pred_fallthru
      _
    // Predicated region
    $region42: #{tpu_custom_call.1} parent=1 // pred_check
      _
    $region43: #{tpu_custom_call.1} parent=1 // pred_check_branch
      %71 = sbr.rel (0) target = $region45
    $region44: #{tpu_custom_call.1} parent=1 // pred_region
      _
    $region45: #{tpu_custom_call.1} parent=1 // pred_fallthru
      _
    // Predicated region
    $region46: #{tpu_custom_call.1} parent=1 // pred_check
      _
    $region47: #{tpu_custom_call.1} parent=1 // pred_check_branch
      %73 = sbr.rel (0) target = $region49
    $region48: #{tpu_custom_call.1} parent=1 // pred_region
      %74 = dma.done [#allocation4], 256
    $region49: #{tpu_custom_call.1} parent=1 // pred_fallthru
      _
    // Predicated region
    $region50: #{tpu_custom_call.1} parent=1 // pred_check
      _
    $region51: #{tpu_custom_call.1} parent=1 // pred_check_branch
      %76 = sbr.rel (0) target = $region53
    $region52: #{tpu_custom_call.1} parent=1 // pred_region
      %77 = dma.done [#allocation7], 512
    $region53: #{tpu_custom_call.1} parent=1 // pred_fallthru
      _
    // Predicated region
    $region54: #{tpu_custom_call.1} parent=1 // pred_check
      _
    $region55: #{tpu_custom_call.1} parent=1 // pred_check_branch
      %79 = sbr.rel (0) target = $region57
    $region56: #{tpu_custom_call.1} parent=1 // pred_region
      %80 = dma.done [#allocation7], 512
    $region57: #{tpu_custom_call.1} parent=1 // pred_fallthru
      _
    %v81 = vld [vmem:[#allocation3] sm:$0xff]
    %v82 = vld [vmem:[#allocation3 + $0x8] sm:$0xff]
    %v83 = vld [vmem:[%s1] sm:$0xff]
    %v84 = vld [vmem:[%s1 + $0x8] sm:$0xff]
    %v85 = vld [vmem:[%s1 + $0x10] sm:$0xff]
    %v86 = vld [vmem:[%s1 + $0x18] sm:$0xff]
    %v87 = vld [vmem:[%s2] sm:$0x1]
    %v89 = vlaneseq
    %v90 = vshrl.u32 %v89, 7
    %v91 = vsub.s32 0, %v90
    %v92 = vrot.slane %v87, %v91
    %vm94 = vcmask 261120
    %v96 = vsel %vm94, %v81, 0
    %v99 = vsel %vm94, %v82, 0
    %101 = vmatprep.subr.mxu0 0.0
    %102 = vmatpush1.msra.mxu0 0.0
    %103 = vmatprep.subr.mxu0 0.0
    %104 = vmatpush1.msra.mxu0 0.0
    %105 = vmatprep.subr.mxu0 0.0
    %106 = vmatpush1.msra.mxu0 0.0
    %107 = vmatprep.subr.mxu0 0.0
    %108 = vmatpush1.msra.mxu0 0.0
    %109 = vmatprep.subr.mxu0 0.0
    %110 = vmatpush1.msra.mxu0 0.0
    %111 = vmatprep.subr.mxu0 0.0
    %112 = vmatpush1.msra.mxu0 0.0
    %113 = vmatprep.subr.mxu0 0.0
    %114 = vmatpush1.msra.mxu0 0.0
    %115 = vmatprep.subr.mxu0 0.0
    %116 = vmatpush1.msra.mxu0 0.0
    %117 = vmatprep.subr.mxu0 0.0
    %118 = vmatpush1.msra.mxu0 0.0
    %119 = vmatprep.subr.mxu0 0.0
    %120 = vmatpush1.msra.mxu0 0.0
    %121 = vmatprep.subr.mxu0 0.0
    %122 = vmatpush1.msra.mxu0 0.0
    %123 = vmatprep.subr.mxu0 0.0
    %124 = vmatpush1.msra.mxu0 0.0
    %125 = vmatprep.subr.mxu0 0.0
    %126 = vmatpush1.msra.mxu0 %v86
    %127 = vmatprep.subr.mxu0 0.0
    %128 = vmatpush1.msra.mxu0 %v85
    %129 = vmatprep.subr.mxu0 0.0
    %130 = vmatpush1.msra.mxu0 %v84
    %131 = vmatprep.subr.mxu0 0.0
    %132 = vmatpush1.msra.mxu0 %v83
    %133 = vmatprep.subr.mxu0 0.0
    %134 = vmatpush2.msra.mxu0 0.0
    %135 = vmatprep.subr.mxu0 0.0
    %136 = vmatpush2.msra.mxu0 0.0
    %137 = vmatprep.subr.mxu0 0.0
    %138 = vmatpush2.msra.mxu0 0.0
    %139 = vmatprep.subr.mxu0 0.0
    %140 = vmatpush2.msra.mxu0 0.0
    %141 = vmatprep.subr.mxu0 0.0
    %142 = vmatpush2.msra.mxu0 0.0
    %143 = vmatprep.subr.mxu0 0.0
    %144 = vmatpush2.msra.mxu0 0.0
    %145 = vmatprep.subr.mxu0 0.0
    %146 = vmatpush2.msra.mxu0 0.0
    %147 = vmatprep.subr.mxu0 0.0
    %148 = vmatpush2.msra.mxu0 0.0
    %149 = vmatprep.subr.mxu0 0.0
    %150 = vmatpush2.msra.mxu0 0.0
    %151 = vmatprep.subr.mxu0 0.0
    %152 = vmatpush2.msra.mxu0 0.0
    %153 = vmatprep.subr.mxu0 0.0
    %154 = vmatpush2.msra.mxu0 0.0
    %155 = vmatprep.subr.mxu0 0.0
    %156 = vmatpush2.msra.mxu0 0.0
    %157 = vmatprep.subr.mxu0 0.0
    %158 = vmatpush2.msra.mxu0 0.0
    %159 = vmatprep.subr.mxu0 0.0
    %160 = vmatpush2.msra.mxu0 0.0
    %161 = vmatprep.subr.mxu0 0.0
    %162 = vmatpush2.msra.mxu0 0.0
    %163 = vmatprep.subr.mxu0 0.0
    %164 = vmatpush2.msra.mxu0 0.0
    %165 = vmatprep.mubr.f32.mxu0 0.0
    %166 = vmatmul.mubr.f32.gmra.mxu0 %v96
    %v167 = vpop.f32.mrf.mxu0
    %v168 = vadd.f32 %v92, %v167
    %v169 = vpop.f32.mrf.mxu0
    %170 = vmatprep.mubr.f32.mxu0 0.0
    %171 = vmatmul.mubr.f32.gmra.mxu0 %v99
    %v172 = vpop.f32.mrf.mxu0
    %v173 = vadd.f32 %v92, %v172
    %v174 = vpop.f32.mrf.mxu0
    %175 = vdwg.mxu0
    %v178 = vcombine.high %v168, %v168
    %v180 = vunpack.c.l.s4 1966171168
    %v181 = vunpack.c.0.s8 %v180
    %v182 = vlaneseq
    %v183 = vshrl.u32 %v182, 7
    %v184 = vsub.s32 %v181, %v183
    %v185 = vrot.slane %v168, %v184
    %v187 = vunpack.c.l.s4 1966171168
    %v188 = vunpack.c.0.s8 %v187
    %v189 = vlaneseq
    %v190 = vshrl.u32 %v189, 7
    %v191 = vsub.s32 %v188, %v190
    %v192 = vrot.slane %v178, %v191
    %v193 = vcombine.high %v185, %v185
    %v194 = vcombine.high %v192, %v192
    %v196 = vunpack.c.l.s4 1966171168
    %v197 = vunpack.c.0.s8 %v196
    %v198 = vlaneseq
    %v199 = vshrl.u32 %v198, 7
    %v200 = vsub.s32 %v197, %v199
    %v201 = vrot.slane %v185, %v200
    %v203 = vunpack.c.l.s4 1966171168
    %v204 = vunpack.c.0.s8 %v203
    %v205 = vlaneseq
    %v206 = vshrl.u32 %v205, 7
    %v207 = vsub.s32 %v204, %v206
    %v208 = vrot.slane %v192, %v207
    %v210 = vunpack.c.l.s4 1966171168
    %v211 = vunpack.c.0.s8 %v210
    %v212 = vlaneseq
    %v213 = vshrl.u32 %v212, 7
    %v214 = vsub.s32 %v211, %v213
    %v215 = vrot.slane %v193, %v214
    %v217 = vunpack.c.l.s4 1966171168
    %v218 = vunpack.c.0.s8 %v217
    %v219 = vlaneseq
    %v220 = vshrl.u32 %v219, 7
    %v221 = vsub.s32 %v218, %v220
    %v222 = vrot.slane %v194, %v221
    %v223 = vcombine.high %v201, %v201
    %v224 = vcombine.high %v208, %v208
    %v225 = vcombine.high %v215, %v215
    %v226 = vcombine.high %v222, %v222
    %v227 = vcombine.high %v173, %v173
    %v229 = vunpack.c.l.s4 1966171168
    %v230 = vunpack.c.0.s8 %v229
    %v231 = vlaneseq
    %v232 = vshrl.u32 %v231, 7
    %v233 = vsub.s32 %v230, %v232
    %v234 = vrot.slane %v173, %v233
    %v236 = vunpack.c.l.s4 1966171168
    %v237 = vunpack.c.0.s8 %v236
    %v238 = vlaneseq
    %v239 = vshrl.u32 %v238, 7
    %v240 = vsub.s32 %v237, %v239
    %v241 = vrot.slane %v227, %v240
    %v242 = vcombine.high %v234, %v234
    %v243 = vcombine.high %v241, %v241
    %v245 = vunpack.c.l.s4 1966171168
    %v246 = vunpack.c.0.s8 %v245
    %v247 = vlaneseq
    %v248 = vshrl.u32 %v247, 7
    %v249 = vsub.s32 %v246, %v248
    %v250 = vrot.slane %v234, %v249
    %v252 = vunpack.c.l.s4 1966171168
    %v253 = vunpack.c.0.s8 %v252
    %v254 = vlaneseq
    %v255 = vshrl.u32 %v254, 7
    %v256 = vsub.s32 %v253, %v255
    %v257 = vrot.slane %v241, %v256
    %v259 = vunpack.c.l.s4 1966171168
    %v260 = vunpack.c.0.s8 %v259
    %v261 = vlaneseq
    %v262 = vshrl.u32 %v261, 7
    %v263 = vsub.s32 %v260, %v262
    %v264 = vrot.slane %v242, %v263
    %v266 = vunpack.c.l.s4 1966171168
    %v267 = vunpack.c.0.s8 %v266
    %v268 = vlaneseq
    %v269 = vshrl.u32 %v268, 7
    %v270 = vsub.s32 %v267, %v269
    %v271 = vrot.slane %v243, %v270
    %v272 = vcombine.high %v250, %v250
    %v273 = vcombine.high %v257, %v257
    %v274 = vcombine.high %v264, %v264
    %v275 = vcombine.high %v271, %v271
    %v276 = vlaneseq
    %v277 = vshrl.u32 %v276, 7
    %v278 = vsub.s32 0, %v277
    %v279 = vrot.slane %v201, %v278
    %v280 = vlaneseq
    %v281 = vshrl.u32 %v280, 7
    %v282 = vsub.s32 0, %v281
    %v283 = vrot.slane %v215, %v282
    %v284 = vlaneseq
    %v285 = vshrl.u32 %v284, 7
    %v286 = vsub.s32 0, %v285
    %v287 = vrot.slane %v223, %v286
    %v288 = vlaneseq
    %v289 = vshrl.u32 %v288, 7
    %v290 = vsub.s32 0, %v289
    %v291 = vrot.slane %v225, %v290
    %v292 = vlaneseq
    %v293 = vshrl.u32 %v292, 7
    %v294 = vsub.s32 0, %v293
    %v295 = vrot.slane %v208, %v294
    %v296 = vlaneseq
    %v297 = vshrl.u32 %v296, 7
    %v298 = vsub.s32 0, %v297
    %v299 = vrot.slane %v222, %v298
    %v300 = vlaneseq
    %v301 = vshrl.u32 %v300, 7
    %v302 = vsub.s32 0, %v301
    %v303 = vrot.slane %v224, %v302
    %v304 = vlaneseq
    %v305 = vshrl.u32 %v304, 7
    %v306 = vsub.s32 0, %v305
    %v307 = vrot.slane %v226, %v306
    %v308 = vlaneseq
    %v309 = vshrl.u32 %v308, 7
    %v310 = vsub.s32 0, %v309
    %v311 = vrot.slane %v250, %v310
    %v312 = vlaneseq
    %v313 = vshrl.u32 %v312, 7
    %v314 = vsub.s32 0, %v313
    %v315 = vrot.slane %v264, %v314
    %v316 = vlaneseq
    %v317 = vshrl.u32 %v316, 7
    %v318 = vsub.s32 0, %v317
    %v319 = vrot.slane %v272, %v318
    %v320 = vlaneseq
    %v321 = vshrl.u32 %v320, 7
    %v322 = vsub.s32 0, %v321
    %v323 = vrot.slane %v274, %v322
    %v324 = vlaneseq
    %v325 = vshrl.u32 %v324, 7
    %v326 = vsub.s32 0, %v325
    %v327 = vrot.slane %v257, %v326
    %v328 = vlaneseq
    %v329 = vshrl.u32 %v328, 7
    %v330 = vsub.s32 0, %v329
    %v331 = vrot.slane %v271, %v330
    %v332 = vlaneseq
    %v333 = vshrl.u32 %v332, 7
    %v334 = vsub.s32 0, %v333
    %v335 = vrot.slane %v273, %v334
    %v336 = vlaneseq
    %v337 = vshrl.u32 %v336, 7
    %v338 = vsub.s32 0, %v337
    %v339 = vrot.slane %v275, %v338
    %356 = vrot.lane.b32.xlu0 %v168, 96
    %v357 = vpop.permute.xlu0 %356
    %358 = vrot.lane.b32.xlu0 %v173, 96
    %v359 = vpop.permute.xlu0 %358
    %v362 = vmul.f32 %v279, %v357
    %v363 = vmul.f32 %v283, %v357
    %v364 = vmul.f32 %v287, %v357
    %v365 = vmul.f32 %v291, %v357
    %v366 = vmul.f32 %v295, %v357
    %v367 = vmul.f32 %v299, %v357
    %v368 = vmul.f32 %v303, %v357
    %v369 = vmul.f32 %v307, %v357
    %v370 = vmul.f32 %v311, %v359
    %v371 = vmul.f32 %v315, %v359
    %v372 = vmul.f32 %v319, %v359
    %v373 = vmul.f32 %v323, %v359
    %v374 = vmul.f32 %v327, %v359
    %v375 = vmul.f32 %v331, %v359
    %v376 = vmul.f32 %v335, %v359
    %v377 = vmul.f32 %v339, %v359
    %v378 = vld [vmem:[%s3] sm:$0xff]
    %v379 = vld [vmem:[%s3 + $0x8] sm:$0xff]
    %v380 = vld [vmem:[%s3 + $0x10] sm:$0xff]
    %v381 = vld [vmem:[%s3 + $0x18] sm:$0xff]
    %v383 = vsel %vm94, %v362, 0
    %v386 = vsel %vm94, %v363, 0
    %v389 = vsel %vm94, %v364, 0
    %v392 = vsel %vm94, %v365, 0
    %v395 = vsel %vm94, %v366, 0
    %v398 = vsel %vm94, %v367, 0
    %v401 = vsel %vm94, %v368, 0
    %v404 = vsel %vm94, %v369, 0
    %v407 = vsel %vm94, %v370, 0
    %v410 = vsel %vm94, %v371, 0
    %v413 = vsel %vm94, %v372, 0
    %v416 = vsel %vm94, %v373, 0
    %v419 = vsel %vm94, %v374, 0
    %v422 = vsel %vm94, %v375, 0
    %v425 = vsel %vm94, %v376, 0
    %v428 = vsel %vm94, %v377, 0
    %430 = vmatprep.subr.mxu0 0.0
    %431 = vmatpush1.msra.mxu0 0.0
    %432 = vmatprep.subr.mxu0 0.0
    %433 = vmatpush1.msra.mxu0 0.0
    %434 = vmatprep.subr.mxu0 0.0
    %435 = vmatpush1.msra.mxu0 0.0
    %436 = vmatprep.subr.mxu0 0.0
    %437 = vmatpush1.msra.mxu0 0.0
    %438 = vmatprep.subr.mxu0 0.0
    %439 = vmatpush1.msra.mxu0 0.0
    %440 = vmatprep.subr.mxu0 0.0
    %441 = vmatpush1.msra.mxu0 0.0
    %442 = vmatprep.subr.mxu0 0.0
    %443 = vmatpush1.msra.mxu0 0.0
    %444 = vmatprep.subr.mxu0 0.0
    %445 = vmatpush1.msra.mxu0 0.0
    %446 = vmatprep.subr.mxu0 0.0
    %447 = vmatpush1.msra.mxu0 0.0
    %448 = vmatprep.subr.mxu0 0.0
    %449 = vmatpush1.msra.mxu0 0.0
    %450 = vmatprep.subr.mxu0 0.0
    %451 = vmatpush1.msra.mxu0 0.0
    %452 = vmatprep.subr.mxu0 0.0
    %453 = vmatpush1.msra.mxu0 0.0
    %454 = vmatprep.subr.mxu0 0.0
    %455 = vmatpush1.msra.mxu0 %v381
    %456 = vmatprep.subr.mxu0 0.0
    %457 = vmatpush1.msra.mxu0 %v380
    %458 = vmatprep.subr.mxu0 0.0
    %459 = vmatpush1.msra.mxu0 %v379
    %460 = vmatprep.subr.mxu0 0.0
    %461 = vmatpush1.msra.mxu0 %v378
    %462 = vmatprep.subr.mxu0 0.0
    %463 = vmatpush2.msra.mxu0 0.0
    %464 = vmatprep.subr.mxu0 0.0
    %465 = vmatpush2.msra.mxu0 0.0
    %466 = vmatprep.subr.mxu0 0.0
    %467 = vmatpush2.msra.mxu0 0.0
    %468 = vmatprep.subr.mxu0 0.0
    %469 = vmatpush2.msra.mxu0 0.0
    %470 = vmatprep.subr.mxu0 0.0
    %471 = vmatpush2.msra.mxu0 0.0
    %472 = vmatprep.subr.mxu0 0.0
    %473 = vmatpush2.msra.mxu0 0.0
    %474 = vmatprep.subr.mxu0 0.0
    %475 = vmatpush2.msra.mxu0 0.0
    %476 = vmatprep.subr.mxu0 0.0
    %477 = vmatpush2.msra.mxu0 0.0
    %478 = vmatprep.subr.mxu0 0.0
    %479 = vmatpush2.msra.mxu0 0.0
    %480 = vmatprep.subr.mxu0 0.0
    %481 = vmatpush2.msra.mxu0 0.0
    %482 = vmatprep.subr.mxu0 0.0
    %483 = vmatpush2.msra.mxu0 0.0
    %484 = vmatprep.subr.mxu0 0.0
    %485 = vmatpush2.msra.mxu0 0.0
    %486 = vmatprep.subr.mxu0 0.0
    %487 = vmatpush2.msra.mxu0 0.0
    %488 = vmatprep.subr.mxu0 0.0
    %489 = vmatpush2.msra.mxu0 0.0
    %490 = vmatprep.subr.mxu0 0.0
    %491 = vmatpush2.msra.mxu0 0.0
    %492 = vmatprep.subr.mxu0 0.0
    %493 = vmatpush2.msra.mxu0 0.0
    %494 = vmatprep.mubr.f32.mxu0 0.0
    %495 = vmatmul.mubr.f32.gmra.mxu0 %v383
    %v496 = vpop.f32.mrf.mxu0
    %v497 = vadd.f32 0.0, %v496
    %v498 = vpop.f32.mrf.mxu0
    %499 = vmatprep.mubr.f32.mxu0 0.0
    %500 = vmatmul.mubr.f32.gmra.mxu0 %v386
    %v501 = vpop.f32.mrf.mxu0
    %v502 = vadd.f32 0.0, %v501
    %v503 = vpop.f32.mrf.mxu0
    %504 = vmatprep.mubr.f32.mxu0 0.0
    %505 = vmatmul.mubr.f32.gmra.mxu0 %v389
    %v506 = vpop.f32.mrf.mxu0
    %v507 = vadd.f32 0.0, %v506
    %v508 = vpop.f32.mrf.mxu0
    %509 = vmatprep.mubr.f32.mxu0 0.0
    %510 = vmatmul.mubr.f32.gmra.mxu0 %v392
    %v511 = vpop.f32.mrf.mxu0
    %v512 = vadd.f32 0.0, %v511
    %v513 = vpop.f32.mrf.mxu0
    %514 = vmatprep.mubr.f32.mxu0 0.0
    %515 = vmatmul.mubr.f32.gmra.mxu0 %v395
    %v516 = vpop.f32.mrf.mxu0
    %v517 = vadd.f32 0.0, %v516
    %v518 = vpop.f32.mrf.mxu0
    %519 = vmatprep.mubr.f32.mxu0 0.0
    %520 = vmatmul.mubr.f32.gmra.mxu0 %v398
    %v521 = vpop.f32.mrf.mxu0
    %v522 = vadd.f32 0.0, %v521
    %v523 = vpop.f32.mrf.mxu0
    %524 = vmatprep.mubr.f32.mxu0 0.0
    %525 = vmatmul.mubr.f32.gmra.mxu0 %v401
    %v526 = vpop.f32.mrf.mxu0
    %v527 = vadd.f32 0.0, %v526
    %v528 = vpop.f32.mrf.mxu0
    %529 = vmatprep.mubr.f32.mxu0 0.0
    %530 = vmatmul.mubr.f32.gmra.mxu0 %v404
    %v531 = vpop.f32.mrf.mxu0
    %v532 = vadd.f32 0.0, %v531
    %v533 = vpop.f32.mrf.mxu0
    %534 = vmatprep.mubr.f32.mxu0 0.0
    %535 = vmatmul.mubr.f32.gmra.mxu0 %v407
    %v536 = vpop.f32.mrf.mxu0
    %v537 = vadd.f32 0.0, %v536
    %v538 = vpop.f32.mrf.mxu0
    %539 = vmatprep.mubr.f32.mxu0 0.0
    %540 = vmatmul.mubr.f32.gmra.mxu0 %v410
    %v541 = vpop.f32.mrf.mxu0
    %v542 = vadd.f32 0.0, %v541
    %v543 = vpop.f32.mrf.mxu0
    %544 = vmatprep.mubr.f32.mxu0 0.0
    %545 = vmatmul.mubr.f32.gmra.mxu0 %v413
    %v546 = vpop.f32.mrf.mxu0
    %v547 = vadd.f32 0.0, %v546
    %v548 = vpop.f32.mrf.mxu0
    %549 = vmatprep.mubr.f32.mxu0 0.0
    %550 = vmatmul.mubr.f32.gmra.mxu0 %v416
    %v551 = vpop.f32.mrf.mxu0
    %v552 = vadd.f32 0.0, %v551
    %v553 = vpop.f32.mrf.mxu0
    %554 = vmatprep.mubr.f32.mxu0 0.0
    %555 = vmatmul.mubr.f32.gmra.mxu0 %v419
    %v556 = vpop.f32.mrf.mxu0
    %v557 = vadd.f32 0.0, %v556
    %v558 = vpop.f32.mrf.mxu0
    %559 = vmatprep.mubr.f32.mxu0 0.0
    %560 = vmatmul.mubr.f32.gmra.mxu0 %v422
    %v561 = vpop.f32.mrf.mxu0
    %v562 = vadd.f32 0.0, %v561
    %v563 = vpop.f32.mrf.mxu0
    %564 = vmatprep.mubr.f32.mxu0 0.0
    %565 = vmatmul.mubr.f32.gmra.mxu0 %v425
    %v566 = vpop.f32.mrf.mxu0
    %v567 = vadd.f32 0.0, %v566
    %v568 = vpop.f32.mrf.mxu0
    %569 = vmatprep.mubr.f32.mxu0 0.0
    %570 = vmatmul.mubr.f32.gmra.mxu0 %v428
    %v571 = vpop.f32.mrf.mxu0
    %v572 = vadd.f32 0.0, %v571
    %v573 = vpop.f32.mrf.mxu0
    %574 = vdwg.mxu0
    %vm575 = vcmask 64512
    %v576 = vsel %vm575, %v497, -inf
    %v577 = vrot.slane %v576, 4
    %v578 = vmax.f32 %v576, %v577
    %v579 = vrot.slane %v578, 2
    %v580 = vmax.f32 %v578, %v579
    %v581 = vrot.slane %v580, 1
    %v582 = vmax.f32 %v580, %v581
    %v583 = vsel %vm575, %v502, -inf
    %v584 = vrot.slane %v583, 4
    %v585 = vmax.f32 %v583, %v584
    %v586 = vrot.slane %v585, 2
    %v587 = vmax.f32 %v585, %v586
    %v588 = vrot.slane %v587, 1
    %v589 = vmax.f32 %v587, %v588
    %v590 = vsel %vm575, %v507, -inf
    %v591 = vrot.slane %v590, 4
    %v592 = vmax.f32 %v590, %v591
    %v593 = vrot.slane %v592, 2
    %v594 = vmax.f32 %v592, %v593
    %v595 = vrot.slane %v594, 1
    %v596 = vmax.f32 %v594, %v595
    %v597 = vsel %vm575, %v512, -inf
    %v598 = vrot.slane %v597, 4
    %v599 = vmax.f32 %v597, %v598
    %v600 = vrot.slane %v599, 2
    %v601 = vmax.f32 %v599, %v600
    %v602 = vrot.slane %v601, 1
    %v603 = vmax.f32 %v601, %v602
    %v604 = vsel %vm575, %v517, -inf
    %v605 = vrot.slane %v604, 4
    %v606 = vmax.f32 %v604, %v605
    %v607 = vrot.slane %v606, 2
    %v608 = vmax.f32 %v606, %v607
    %v609 = vrot.slane %v608, 1
    %v610 = vmax.f32 %v608, %v609
    %v611 = vsel %vm575, %v522, -inf
    %v612 = vrot.slane %v611, 4
    %v613 = vmax.f32 %v611, %v612
    %v614 = vrot.slane %v613, 2
    %v615 = vmax.f32 %v613, %v614
    %v616 = vrot.slane %v615, 1
    %v617 = vmax.f32 %v615, %v616
    %v618 = vsel %vm575, %v527, -inf
    %v619 = vrot.slane %v618, 4
    %v620 = vmax.f32 %v618, %v619
    %v621 = vrot.slane %v620, 2
    %v622 = vmax.f32 %v620, %v621
    %v623 = vrot.slane %v622, 1
    %v624 = vmax.f32 %v622, %v623
    %v625 = vsel %vm575, %v532, -inf
    %v626 = vrot.slane %v625, 4
    %v627 = vmax.f32 %v625, %v626
    %v628 = vrot.slane %v627, 2
    %v629 = vmax.f32 %v627, %v628
    %v630 = vrot.slane %v629, 1
    %v631 = vmax.f32 %v629, %v630
    %v632 = vsel %vm575, %v537, -inf
    %v633 = vrot.slane %v632, 4
    %v634 = vmax.f32 %v632, %v633
    %v635 = vrot.slane %v634, 2
    %v636 = vmax.f32 %v634, %v635
    %v637 = vrot.slane %v636, 1
    %v638 = vmax.f32 %v636, %v637
    %v639 = vsel %vm575, %v542, -inf
    %v640 = vrot.slane %v639, 4
    %v641 = vmax.f32 %v639, %v640
    %v642 = vrot.slane %v641, 2
    %v643 = vmax.f32 %v641, %v642
    %v644 = vrot.slane %v643, 1
    %v645 = vmax.f32 %v643, %v644
    %v646 = vsel %vm575, %v547, -inf
    %v647 = vrot.slane %v646, 4
    %v648 = vmax.f32 %v646, %v647
    %v649 = vrot.slane %v648, 2
    %v650 = vmax.f32 %v648, %v649
    %v651 = vrot.slane %v650, 1
    %v652 = vmax.f32 %v650, %v651
    %v653 = vsel %vm575, %v552, -inf
    %v654 = vrot.slane %v653, 4
    %v655 = vmax.f32 %v653, %v654
    %v656 = vrot.slane %v655, 2
    %v657 = vmax.f32 %v655, %v656
    %v658 = vrot.slane %v657, 1
    %v659 = vmax.f32 %v657, %v658
    %v660 = vsel %vm575, %v557, -inf
    %v661 = vrot.slane %v660, 4
    %v662 = vmax.f32 %v660, %v661
    %v663 = vrot.slane %v662, 2
    %v664 = vmax.f32 %v662, %v663
    %v665 = vrot.slane %v664, 1
    %v666 = vmax.f32 %v664, %v665
    %v667 = vsel %vm575, %v562, -inf
    %v668 = vrot.slane %v667, 4
    %v669 = vmax.f32 %v667, %v668
    %v670 = vrot.slane %v669, 2
    %v671 = vmax.f32 %v669, %v670
    %v672 = vrot.slane %v671, 1
    %v673 = vmax.f32 %v671, %v672
    %v674 = vsel %vm575, %v567, -inf
    %v675 = vrot.slane %v674, 4
    %v676 = vmax.f32 %v674, %v675
    %v677 = vrot.slane %v676, 2
    %v678 = vmax.f32 %v676, %v677
    %v679 = vrot.slane %v678, 1
    %v680 = vmax.f32 %v678, %v679
    %v681 = vsel %vm575, %v572, -inf
    %v682 = vrot.slane %v681, 4
    %v683 = vmax.f32 %v681, %v682
    %v684 = vrot.slane %v683, 2
    %v685 = vmax.f32 %v683, %v684
    %v686 = vrot.slane %v685, 1
    %v687 = vmax.f32 %v685, %v686
    %v688 = vsub.f32 %v497, %v582
    %v689 = vsub.f32 %v502, %v589
    %v690 = vsub.f32 %v507, %v596
    %v691 = vsub.f32 %v512, %v603
    %v692 = vsub.f32 %v517, %v610
    %v693 = vsub.f32 %v522, %v617
    %v694 = vsub.f32 %v527, %v624
    %v695 = vsub.f32 %v532, %v631
    %v696 = vsub.f32 %v537, %v638
    %v697 = vsub.f32 %v542, %v645
    %v698 = vsub.f32 %v547, %v652
    %v699 = vsub.f32 %v552, %v659
    %v700 = vsub.f32 %v557, %v666
    %v701 = vsub.f32 %v562, %v673
    %v702 = vsub.f32 %v567, %v680
    %v703 = vsub.f32 %v572, %v687
    %v704 = vmul.f32 %v688, 1.442695
    %v705 = vpow.pop %v704
    %v706 = vmul.f32 %v689, 1.442695
    %v707 = vpow.pop %v706
    %v708 = vmul.f32 %v690, 1.442695
    %v709 = vpow.pop %v708
    %v710 = vmul.f32 %v691, 1.442695
    %v711 = vpow.pop %v710
    %v712 = vmul.f32 %v692, 1.442695
    %v713 = vpow.pop %v712
    %v714 = vmul.f32 %v693, 1.442695
    %v715 = vpow.pop %v714
    %v716 = vmul.f32 %v694, 1.442695
    %v717 = vpow.pop %v716
    %v718 = vmul.f32 %v695, 1.442695
    %v719 = vpow.pop %v718
    %v720 = vmul.f32 %v696, 1.442695
    %v721 = vpow.pop %v720
    %v722 = vmul.f32 %v697, 1.442695
    %v723 = vpow.pop %v722
    %v724 = vmul.f32 %v698, 1.442695
    %v725 = vpow.pop %v724
    %v726 = vmul.f32 %v699, 1.442695
    %v727 = vpow.pop %v726
    %v728 = vmul.f32 %v700, 1.442695
    %v729 = vpow.pop %v728
    %v730 = vmul.f32 %v701, 1.442695
    %v731 = vpow.pop %v730
    %v732 = vmul.f32 %v702, 1.442695
    %v733 = vpow.pop %v732
    %v734 = vmul.f32 %v703, 1.442695
    %v735 = vpow.pop %v734
    %v736 = vsel %vm575, %v705, 0.0
    %v737 = vrot.slane %v736, 4
    %v738 = vadd.f32 %v736, %v737
    %v739 = vrot.slane %v738, 2
    %v740 = vadd.f32 %v738, %v739
    %v741 = vrot.slane %v740, 1
    %v742 = vadd.f32 %v740, %v741
    %v743 = vsel %vm575, %v707, 0.0
    %v744 = vrot.slane %v743, 4
    %v745 = vadd.f32 %v743, %v744
    %v746 = vrot.slane %v745, 2
    %v747 = vadd.f32 %v745, %v746
    %v748 = vrot.slane %v747, 1
    %v749 = vadd.f32 %v747, %v748
    %v750 = vsel %vm575, %v709, 0.0
    %v751 = vrot.slane %v750, 4
    %v752 = vadd.f32 %v750, %v751
    %v753 = vrot.slane %v752, 2
    %v754 = vadd.f32 %v752, %v753
    %v755 = vrot.slane %v754, 1
    %v756 = vadd.f32 %v754, %v755
    %v757 = vsel %vm575, %v711, 0.0
    %v758 = vrot.slane %v757, 4
    %v759 = vadd.f32 %v757, %v758
    %v760 = vrot.slane %v759, 2
    %v761 = vadd.f32 %v759, %v760
    %v762 = vrot.slane %v761, 1
    %v763 = vadd.f32 %v761, %v762
    %v764 = vsel %vm575, %v713, 0.0
    %v765 = vrot.slane %v764, 4
    %v766 = vadd.f32 %v764, %v765
    %v767 = vrot.slane %v766, 2
    %v768 = vadd.f32 %v766, %v767
    %v769 = vrot.slane %v768, 1
    %v770 = vadd.f32 %v768, %v769
    %v771 = vsel %vm575, %v715, 0.0
    %v772 = vrot.slane %v771, 4
    %v773 = vadd.f32 %v771, %v772
    %v774 = vrot.slane %v773, 2
    %v775 = vadd.f32 %v773, %v774
    %v776 = vrot.slane %v775, 1
    %v777 = vadd.f32 %v775, %v776
    %v778 = vsel %vm575, %v717, 0.0
    %v779 = vrot.slane %v778, 4
    %v780 = vadd.f32 %v778, %v779
    %v781 = vrot.slane %v780, 2
    %v782 = vadd.f32 %v780, %v781
    %v783 = vrot.slane %v782, 1
    %v784 = vadd.f32 %v782, %v783
    %v785 = vsel %vm575, %v719, 0.0
    %v786 = vrot.slane %v785, 4
    %v787 = vadd.f32 %v785, %v786
    %v788 = vrot.slane %v787, 2
    %v789 = vadd.f32 %v787, %v788
    %v790 = vrot.slane %v789, 1
    %v791 = vadd.f32 %v789, %v790
    %v792 = vsel %vm575, %v721, 0.0
    %v793 = vrot.slane %v792, 4
    %v794 = vadd.f32 %v792, %v793
    %v795 = vrot.slane %v794, 2
    %v796 = vadd.f32 %v794, %v795
    %v797 = vrot.slane %v796, 1
    %v798 = vadd.f32 %v796, %v797
    %v799 = vsel %vm575, %v723, 0.0
    %v800 = vrot.slane %v799, 4
    %v801 = vadd.f32 %v799, %v800
    %v802 = vrot.slane %v801, 2
    %v803 = vadd.f32 %v801, %v802
    %v804 = vrot.slane %v803, 1
    %v805 = vadd.f32 %v803, %v804
    %v806 = vsel %vm575, %v725, 0.0
    %v807 = vrot.slane %v806, 4
    %v808 = vadd.f32 %v806, %v807
    %v809 = vrot.slane %v808, 2
    %v810 = vadd.f32 %v808, %v809
    %v811 = vrot.slane %v810, 1
    %v812 = vadd.f32 %v810, %v811
    %v813 = vsel %vm575, %v727, 0.0
    %v814 = vrot.slane %v813, 4
    %v815 = vadd.f32 %v813, %v814
    %v816 = vrot.slane %v815, 2
    %v817 = vadd.f32 %v815, %v816
    %v818 = vrot.slane %v817, 1
    %v819 = vadd.f32 %v817, %v818
    %v820 = vsel %vm575, %v729, 0.0
    %v821 = vrot.slane %v820, 4
    %v822 = vadd.f32 %v820, %v821
    %v823 = vrot.slane %v822, 2
    %v824 = vadd.f32 %v822, %v823
    %v825 = vrot.slane %v824, 1
    %v826 = vadd.f32 %v824, %v825
    %v827 = vsel %vm575, %v731, 0.0
    %v828 = vrot.slane %v827, 4
    %v829 = vadd.f32 %v827, %v828
    %v830 = vrot.slane %v829, 2
    %v831 = vadd.f32 %v829, %v830
    %v832 = vrot.slane %v831, 1
    %v833 = vadd.f32 %v831, %v832
    %v834 = vsel %vm575, %v733, 0.0
    %v835 = vrot.slane %v834, 4
    %v836 = vadd.f32 %v834, %v835
    %v837 = vrot.slane %v836, 2
    %v838 = vadd.f32 %v836, %v837
    %v839 = vrot.slane %v838, 1
    %v840 = vadd.f32 %v838, %v839
    %v841 = vsel %vm575, %v735, 0.0
    %v842 = vrot.slane %v841, 4
    %v843 = vadd.f32 %v841, %v842
    %v844 = vrot.slane %v843, 2
    %v845 = vadd.f32 %v843, %v844
    %v846 = vrot.slane %v845, 1
    %v847 = vadd.f32 %v845, %v846
    %v848 = vrcp.pop %v742
    %v849 = vmul.f32 %v705, %v848
    %v850 = vrcp.pop %v749
    %v851 = vmul.f32 %v707, %v850
    %v852 = vrcp.pop %v756
    %v853 = vmul.f32 %v709, %v852
    %v854 = vrcp.pop %v763
    %v855 = vmul.f32 %v711, %v854
    %v856 = vrcp.pop %v770
    %v857 = vmul.f32 %v713, %v856
    %v858 = vrcp.pop %v777
    %v859 = vmul.f32 %v715, %v858
    %v860 = vrcp.pop %v784
    %v861 = vmul.f32 %v717, %v860
    %v862 = vrcp.pop %v791
    %v863 = vmul.f32 %v719, %v862
    %v864 = vrcp.pop %v798
    %v865 = vmul.f32 %v721, %v864
    %v866 = vrcp.pop %v805
    %v867 = vmul.f32 %v723, %v866
    %v868 = vrcp.pop %v812
    %v869 = vmul.f32 %v725, %v868
    %v870 = vrcp.pop %v819
    %v871 = vmul.f32 %v727, %v870
    %v872 = vrcp.pop %v826
    %v873 = vmul.f32 %v729, %v872
    %v874 = vrcp.pop %v833
    %v875 = vmul.f32 %v731, %v874
    %v876 = vrcp.pop %v840
    %v877 = vmul.f32 %v733, %v876
    %v878 = vrcp.pop %v847
    %v879 = vmul.f32 %v735, %v878
    %v880 = vld [vmem:[%s4] sm:$0xff]
    %v882 = vsel %vm575, %v849, 0
    %v885 = vsel %vm575, %v851, 0
    %v888 = vsel %vm575, %v853, 0
    %v891 = vsel %vm575, %v855, 0
    %v894 = vsel %vm575, %v857, 0
    %v897 = vsel %vm575, %v859, 0
    %v900 = vsel %vm575, %v861, 0
    %v903 = vsel %vm575, %v863, 0
    %v906 = vsel %vm575, %v865, 0
    %v909 = vsel %vm575, %v867, 0
    %v912 = vsel %vm575, %v869, 0
    %v915 = vsel %vm575, %v871, 0
    %v918 = vsel %vm575, %v873, 0
    %v921 = vsel %vm575, %v875, 0
    %v924 = vsel %vm575, %v877, 0
    %v927 = vsel %vm575, %v879, 0
    %929 = vmatprep.subr.mxu0 0.0
    %930 = vmatpush1.msra.mxu0 0.0
    %931 = vmatprep.subr.mxu0 0.0
    %932 = vmatpush1.msra.mxu0 0.0
    %933 = vmatprep.subr.mxu0 0.0
    %934 = vmatpush1.msra.mxu0 0.0
    %935 = vmatprep.subr.mxu0 0.0
    %936 = vmatpush1.msra.mxu0 0.0
    %937 = vmatprep.subr.mxu0 0.0
    %938 = vmatpush1.msra.mxu0 0.0
    %939 = vmatprep.subr.mxu0 0.0
    %940 = vmatpush1.msra.mxu0 0.0
    %941 = vmatprep.subr.mxu0 0.0
    %942 = vmatpush1.msra.mxu0 0.0
    %943 = vmatprep.subr.mxu0 0.0
    %944 = vmatpush1.msra.mxu0 0.0
    %945 = vmatprep.subr.mxu0 0.0
    %946 = vmatpush1.msra.mxu0 0.0
    %947 = vmatprep.subr.mxu0 0.0
    %948 = vmatpush1.msra.mxu0 0.0
    %949 = vmatprep.subr.mxu0 0.0
    %950 = vmatpush1.msra.mxu0 0.0
    %951 = vmatprep.subr.mxu0 0.0
    %952 = vmatpush1.msra.mxu0 0.0
    %953 = vmatprep.subr.mxu0 0.0
    %954 = vmatpush1.msra.mxu0 0.0
    %955 = vmatprep.subr.mxu0 0.0
    %956 = vmatpush1.msra.mxu0 0.0
    %957 = vmatprep.subr.mxu0 0.0
    %958 = vmatpush1.msra.mxu0 0.0
    %959 = vmatprep.subr.mxu0 0.0
    %960 = vmatpush1.msra.mxu0 %v880
    %961 = vmatprep.subr.mxu0 0.0
    %962 = vmatpush2.msra.mxu0 0.0
    %963 = vmatprep.subr.mxu0 0.0
    %964 = vmatpush2.msra.mxu0 0.0
    %965 = vmatprep.subr.mxu0 0.0
    %966 = vmatpush2.msra.mxu0 0.0
    %967 = vmatprep.subr.mxu0 0.0
    %968 = vmatpush2.msra.mxu0 0.0
    %969 = vmatprep.subr.mxu0 0.0
    %970 = vmatpush2.msra.mxu0 0.0
    %971 = vmatprep.subr.mxu0 0.0
    %972 = vmatpush2.msra.mxu0 0.0
    %973 = vmatprep.subr.mxu0 0.0
    %974 = vmatpush2.msra.mxu0 0.0
    %975 = vmatprep.subr.mxu0 0.0
    %976 = vmatpush2.msra.mxu0 0.0
    %977 = vmatprep.subr.mxu0 0.0
    %978 = vmatpush2.msra.mxu0 0.0
    %979 = vmatprep.subr.mxu0 0.0
    %980 = vmatpush2.msra.mxu0 0.0
    %981 = vmatprep.subr.mxu0 0.0
    %982 = vmatpush2.msra.mxu0 0.0
    %983 = vmatprep.subr.mxu0 0.0
    %984 = vmatpush2.msra.mxu0 0.0
    %985 = vmatprep.subr.mxu0 0.0
    %986 = vmatpush2.msra.mxu0 0.0
    %987 = vmatprep.subr.mxu0 0.0
    %988 = vmatpush2.msra.mxu0 0.0
    %989 = vmatprep.subr.mxu0 0.0
    %990 = vmatpush2.msra.mxu0 0.0
    %991 = vmatprep.subr.mxu0 0.0
    %992 = vmatpush2.msra.mxu0 0.0
    %993 = vmatprep.mubr.f32.mxu0 0.0
    %994 = vmatmul.mubr.f32.gmra.mxu0 %v882
    %v995 = vpop.f32.mrf.mxu0
    %v996 = vadd.f32 0.0, %v995
    %v997 = vpop.f32.mrf.mxu0
    %998 = vmatprep.mubr.f32.mxu0 0.0
    %999 = vmatmul.mubr.f32.gmra.mxu0 %v885
    %v1000 = vpop.f32.mrf.mxu0
    %v1001 = vadd.f32 0.0, %v1000
    %v1002 = vpop.f32.mrf.mxu0
    %1003 = vmatprep.mubr.f32.mxu0 0.0
    %1004 = vmatmul.mubr.f32.gmra.mxu0 %v888
    %v1005 = vpop.f32.mrf.mxu0
    %v1006 = vadd.f32 0.0, %v1005
    %v1007 = vpop.f32.mrf.mxu0
    %1008 = vmatprep.mubr.f32.mxu0 0.0
    %1009 = vmatmul.mubr.f32.gmra.mxu0 %v891
    %v1010 = vpop.f32.mrf.mxu0
    %v1011 = vadd.f32 0.0, %v1010
    %v1012 = vpop.f32.mrf.mxu0
    %1013 = vmatprep.mubr.f32.mxu0 0.0
    %1014 = vmatmul.mubr.f32.gmra.mxu0 %v894
    %v1015 = vpop.f32.mrf.mxu0
    %v1016 = vadd.f32 0.0, %v1015
    %v1017 = vpop.f32.mrf.mxu0
    %1018 = vmatprep.mubr.f32.mxu0 0.0
    %1019 = vmatmul.mubr.f32.gmra.mxu0 %v897
    %v1020 = vpop.f32.mrf.mxu0
    %v1021 = vadd.f32 0.0, %v1020
    %v1022 = vpop.f32.mrf.mxu0
    %1023 = vmatprep.mubr.f32.mxu0 0.0
    %1024 = vmatmul.mubr.f32.gmra.mxu0 %v900
    %v1025 = vpop.f32.mrf.mxu0
    %v1026 = vadd.f32 0.0, %v1025
    %v1027 = vpop.f32.mrf.mxu0
    %1028 = vmatprep.mubr.f32.mxu0 0.0
    %1029 = vmatmul.mubr.f32.gmra.mxu0 %v903
    %v1030 = vpop.f32.mrf.mxu0
    %v1031 = vadd.f32 0.0, %v1030
    %v1032 = vpop.f32.mrf.mxu0
    %1033 = vmatprep.mubr.f32.mxu0 0.0
    %1034 = vmatmul.mubr.f32.gmra.mxu0 %v906
    %v1035 = vpop.f32.mrf.mxu0
    %v1036 = vadd.f32 0.0, %v1035
    %v1037 = vpop.f32.mrf.mxu0
    %1038 = vmatprep.mubr.f32.mxu0 0.0
    %1039 = vmatmul.mubr.f32.gmra.mxu0 %v909
    %v1040 = vpop.f32.mrf.mxu0
    %v1041 = vadd.f32 0.0, %v1040
    %v1042 = vpop.f32.mrf.mxu0
    %1043 = vmatprep.mubr.f32.mxu0 0.0
    %1044 = vmatmul.mubr.f32.gmra.mxu0 %v912
    %v1045 = vpop.f32.mrf.mxu0
    %v1046 = vadd.f32 0.0, %v1045
    %v1047 = vpop.f32.mrf.mxu0
    %1048 = vmatprep.mubr.f32.mxu0 0.0
    %1049 = vmatmul.mubr.f32.gmra.mxu0 %v915
    %v1050 = vpop.f32.mrf.mxu0
    %v1051 = vadd.f32 0.0, %v1050
    %v1052 = vpop.f32.mrf.mxu0
    %1053 = vmatprep.mubr.f32.mxu0 0.0
    %1054 = vmatmul.mubr.f32.gmra.mxu0 %v918
    %v1055 = vpop.f32.mrf.mxu0
    %v1056 = vadd.f32 0.0, %v1055
    %v1057 = vpop.f32.mrf.mxu0
    %1058 = vmatprep.mubr.f32.mxu0 0.0
    %1059 = vmatmul.mubr.f32.gmra.mxu0 %v921
    %v1060 = vpop.f32.mrf.mxu0
    %v1061 = vadd.f32 0.0, %v1060
    %v1062 = vpop.f32.mrf.mxu0
    %1063 = vmatprep.mubr.f32.mxu0 0.0
    %1064 = vmatmul.mubr.f32.gmra.mxu0 %v924
    %v1065 = vpop.f32.mrf.mxu0
    %v1066 = vadd.f32 0.0, %v1065
    %v1067 = vpop.f32.mrf.mxu0
    %1068 = vmatprep.mubr.f32.mxu0 0.0
    %1069 = vmatmul.mubr.f32.gmra.mxu0 %v927
    %v1070 = vpop.f32.mrf.mxu0
    %v1071 = vadd.f32 0.0, %v1070
    %v1072 = vpop.f32.mrf.mxu0
    %1073 = vdwg.mxu0
    %1074 = vrot.lane.b32.xlu0 %v168, 64
    %v1075 = vpop.permute.xlu0 %1074
    %1076 = vrot.lane.b32.xlu0 %v173, 64
    %v1077 = vpop.permute.xlu0 %1076
    %v1080 = vmul.f32 %v996, %v1075
    %v1081 = vmul.f32 %v1001, %v1075
    %v1082 = vmul.f32 %v1006, %v1075
    %v1083 = vmul.f32 %v1011, %v1075
    %v1084 = vmul.f32 %v1016, %v1075
    %v1085 = vmul.f32 %v1021, %v1075
    %v1086 = vmul.f32 %v1026, %v1075
    %v1087 = vmul.f32 %v1031, %v1075
    %v1088 = vmul.f32 %v1036, %v1077
    %v1089 = vmul.f32 %v1041, %v1077
    %v1090 = vmul.f32 %v1046, %v1077
    %v1091 = vmul.f32 %v1051, %v1077
    %v1092 = vmul.f32 %v1056, %v1077
    %v1093 = vmul.f32 %v1061, %v1077
    %v1094 = vmul.f32 %v1066, %v1077
    %v1095 = vmul.f32 %v1071, %v1077
    %v1096 = vsel %vm94, %v1080, 0.0
    %v1097 = vrot.slane %v1096, 4
    %v1098 = vadd.f32 %v1096, %v1097
    %v1099 = vrot.slane %v1098, 2
    %v1100 = vadd.f32 %v1098, %v1099
    %v1101 = vrot.slane %v1100, 1
    %v1102 = vadd.f32 %v1100, %v1101
    %v1103 = vsel %vm94, %v1081, 0.0
    %v1104 = vrot.slane %v1103, 4
    %v1105 = vadd.f32 %v1103, %v1104
    %v1106 = vrot.slane %v1105, 2
    %v1107 = vadd.f32 %v1105, %v1106
    %v1108 = vrot.slane %v1107, 1
    %v1109 = vadd.f32 %v1107, %v1108
    %v1110 = vsel %vm94, %v1082, 0.0
    %v1111 = vrot.slane %v1110, 4
    %v1112 = vadd.f32 %v1110, %v1111
    %v1113 = vrot.slane %v1112, 2
    %v1114 = vadd.f32 %v1112, %v1113
    %v1115 = vrot.slane %v1114, 1
    %v1116 = vadd.f32 %v1114, %v1115
    %v1117 = vsel %vm94, %v1083, 0.0
    %v1118 = vrot.slane %v1117, 4
    %v1119 = vadd.f32 %v1117, %v1118
    %v1120 = vrot.slane %v1119, 2
    %v1121 = vadd.f32 %v1119, %v1120
    %v1122 = vrot.slane %v1121, 1
    %v1123 = vadd.f32 %v1121, %v1122
    %v1124 = vsel %vm94, %v1084, 0.0
    %v1125 = vrot.slane %v1124, 4
    %v1126 = vadd.f32 %v1124, %v1125
    %v1127 = vrot.slane %v1126, 2
    %v1128 = vadd.f32 %v1126, %v1127
    %v1129 = vrot.slane %v1128, 1
    %v1130 = vadd.f32 %v1128, %v1129
    %v1131 = vsel %vm94, %v1085, 0.0
    %v1132 = vrot.slane %v1131, 4
    %v1133 = vadd.f32 %v1131, %v1132
    %v1134 = vrot.slane %v1133, 2
    %v1135 = vadd.f32 %v1133, %v1134
    %v1136 = vrot.slane %v1135, 1
    %v1137 = vadd.f32 %v1135, %v1136
    %v1138 = vsel %vm94, %v1086, 0.0
    %v1139 = vrot.slane %v1138, 4
    %v1140 = vadd.f32 %v1138, %v1139
    %v1141 = vrot.slane %v1140, 2
    %v1142 = vadd.f32 %v1140, %v1141
    %v1143 = vrot.slane %v1142, 1
    %v1144 = vadd.f32 %v1142, %v1143
    %v1145 = vsel %vm94, %v1087, 0.0
    %v1146 = vrot.slane %v1145, 4
    %v1147 = vadd.f32 %v1145, %v1146
    %v1148 = vrot.slane %v1147, 2
    %v1149 = vadd.f32 %v1147, %v1148
    %v1150 = vrot.slane %v1149, 1
    %v1151 = vadd.f32 %v1149, %v1150
    %v1152 = vsel %vm94, %v1088, 0.0
    %v1153 = vrot.slane %v1152, 4
    %v1154 = vadd.f32 %v1152, %v1153
    %v1155 = vrot.slane %v1154, 2
    %v1156 = vadd.f32 %v1154, %v1155
    %v1157 = vrot.slane %v1156, 1
    %v1158 = vadd.f32 %v1156, %v1157
    %v1159 = vsel %vm94, %v1089, 0.0
    %v1160 = vrot.slane %v1159, 4
    %v1161 = vadd.f32 %v1159, %v1160
    %v1162 = vrot.slane %v1161, 2
    %v1163 = vadd.f32 %v1161, %v1162
    %v1164 = vrot.slane %v1163, 1
    %v1165 = vadd.f32 %v1163, %v1164
    %v1166 = vsel %vm94, %v1090, 0.0
    %v1167 = vrot.slane %v1166, 4
    %v1168 = vadd.f32 %v1166, %v1167
    %v1169 = vrot.slane %v1168, 2
    %v1170 = vadd.f32 %v1168, %v1169
    %v1171 = vrot.slane %v1170, 1
    %v1172 = vadd.f32 %v1170, %v1171
    %v1173 = vsel %vm94, %v1091, 0.0
    %v1174 = vrot.slane %v1173, 4
    %v1175 = vadd.f32 %v1173, %v1174
    %v1176 = vrot.slane %v1175, 2
    %v1177 = vadd.f32 %v1175, %v1176
    %v1178 = vrot.slane %v1177, 1
    %v1179 = vadd.f32 %v1177, %v1178
    %v1180 = vsel %vm94, %v1092, 0.0
    %v1181 = vrot.slane %v1180, 4
    %v1182 = vadd.f32 %v1180, %v1181
    %v1183 = vrot.slane %v1182, 2
    %v1184 = vadd.f32 %v1182, %v1183
    %v1185 = vrot.slane %v1184, 1
    %v1186 = vadd.f32 %v1184, %v1185
    %v1187 = vsel %vm94, %v1093, 0.0
    %v1188 = vrot.slane %v1187, 4
    %v1189 = vadd.f32 %v1187, %v1188
    %v1190 = vrot.slane %v1189, 2
    %v1191 = vadd.f32 %v1189, %v1190
    %v1192 = vrot.slane %v1191, 1
    %v1193 = vadd.f32 %v1191, %v1192
    %v1194 = vsel %vm94, %v1094, 0.0
    %v1195 = vrot.slane %v1194, 4
    %v1196 = vadd.f32 %v1194, %v1195
    %v1197 = vrot.slane %v1196, 2
    %v1198 = vadd.f32 %v1196, %v1197
    %v1199 = vrot.slane %v1198, 1
    %v1200 = vadd.f32 %v1198, %v1199
    %v1201 = vsel %vm94, %v1095, 0.0
    %v1202 = vrot.slane %v1201, 4
    %v1203 = vadd.f32 %v1201, %v1202
    %v1204 = vrot.slane %v1203, 2
    %v1205 = vadd.f32 %v1203, %v1204
    %v1206 = vrot.slane %v1205, 1
    %v1207 = vadd.f32 %v1205, %v1206
    %v1208 = vld [vmem:[#allocation6] sm:$0xff]
    %v1209 = vld [vmem:[#allocation6 + $0x8] sm:$0xff]
    %v1210 = vld [vmem:[#allocation6 + $0x10] sm:$0xff]
    %v1211 = vld [vmem:[#allocation6 + $0x18] sm:$0xff]
    %v1212 = vld [vmem:[%s6] sm:$0x1]
    %v1214 = vlaneseq
    %v1215 = vshrl.u32 %v1214, 7
    %v1216 = vsub.s32 0, %v1215
    %v1217 = vrot.slane %v1212, %v1216
    %vm1235 = vcmask 1041409
    %v1236 = vsel %vm1235, %v1109, %v1102
    %vm1237 = vcmask 1042434
    %v1238 = vsel %vm1237, %v1116, %v1236
    %vm1239 = vcmask 1043459
    %v1240 = vsel %vm1239, %v1123, %v1238
    %vm1241 = vcmask 1044484
    %v1242 = vsel %vm1241, %v1130, %v1240
    %vm1243 = vcmask 1045509
    %v1244 = vsel %vm1243, %v1137, %v1242
    %vm1245 = vcmask 1046534
    %v1246 = vsel %vm1245, %v1144, %v1244
    %vm1247 = vcmask 1047559
    %v1248 = vsel %vm1247, %v1151, %v1246
    %v1249 = vsel %vm1235, %v1165, %v1158
    %v1250 = vsel %vm1237, %v1172, %v1249
    %v1251 = vsel %vm1239, %v1179, %v1250
    %v1252 = vsel %vm1241, %v1186, %v1251
    %v1253 = vsel %vm1243, %v1193, %v1252
    %v1254 = vsel %vm1245, %v1200, %v1253
    %v1255 = vsel %vm1247, %v1207, %v1254
    %v1256 = vsel %vm94, %v1248, 0
    %v1258 = vsel %vm94, %v1255, 0
    %1260 = vmatprep.subr.mxu0 0.0
    %1261 = vmatpush1.msra.mxu0 0.0
    %1262 = vmatprep.subr.mxu0 0.0
    %1263 = vmatpush1.msra.mxu0 0.0
    %1264 = vmatprep.subr.mxu0 0.0
    %1265 = vmatpush1.msra.mxu0 0.0
    %1266 = vmatprep.subr.mxu0 0.0
    %1267 = vmatpush1.msra.mxu0 0.0
    %1268 = vmatprep.subr.mxu0 0.0
    %1269 = vmatpush1.msra.mxu0 0.0
    %1270 = vmatprep.subr.mxu0 0.0
    %1271 = vmatpush1.msra.mxu0 0.0
    %1272 = vmatprep.subr.mxu0 0.0
    %1273 = vmatpush1.msra.mxu0 0.0
    %1274 = vmatprep.subr.mxu0 0.0
    %1275 = vmatpush1.msra.mxu0 0.0
    %1276 = vmatprep.subr.mxu0 0.0
    %1277 = vmatpush1.msra.mxu0 0.0
    %1278 = vmatprep.subr.mxu0 0.0
    %1279 = vmatpush1.msra.mxu0 0.0
    %1280 = vmatprep.subr.mxu0 0.0
    %1281 = vmatpush1.msra.mxu0 0.0
    %1282 = vmatprep.subr.mxu0 0.0
    %1283 = vmatpush1.msra.mxu0 0.0
    %1284 = vmatprep.subr.mxu0 0.0
    %1285 = vmatpush1.msra.mxu0 %v1211
    %1286 = vmatprep.subr.mxu0 0.0
    %1287 = vmatpush1.msra.mxu0 %v1210
    %1288 = vmatprep.subr.mxu0 0.0
    %1289 = vmatpush1.msra.mxu0 %v1209
    %1290 = vmatprep.subr.mxu0 0.0
    %1291 = vmatpush1.msra.mxu0 %v1208
    %1292 = vmatprep.subr.mxu0 0.0
    %1293 = vmatpush2.msra.mxu0 0.0
    %1294 = vmatprep.subr.mxu0 0.0
    %1295 = vmatpush2.msra.mxu0 0.0
    %1296 = vmatprep.subr.mxu0 0.0
    %1297 = vmatpush2.msra.mxu0 0.0
    %1298 = vmatprep.subr.mxu0 0.0
    %1299 = vmatpush2.msra.mxu0 0.0
    %1300 = vmatprep.subr.mxu0 0.0
    %1301 = vmatpush2.msra.mxu0 0.0
    %1302 = vmatprep.subr.mxu0 0.0
    %1303 = vmatpush2.msra.mxu0 0.0
    %1304 = vmatprep.subr.mxu0 0.0
    %1305 = vmatpush2.msra.mxu0 0.0
    %1306 = vmatprep.subr.mxu0 0.0
    %1307 = vmatpush2.msra.mxu0 0.0
    %1308 = vmatprep.subr.mxu0 0.0
    %1309 = vmatpush2.msra.mxu0 0.0
    %1310 = vmatprep.subr.mxu0 0.0
    %1311 = vmatpush2.msra.mxu0 0.0
    %1312 = vmatprep.subr.mxu0 0.0
    %1313 = vmatpush2.msra.mxu0 0.0
    %1314 = vmatprep.subr.mxu0 0.0
    %1315 = vmatpush2.msra.mxu0 0.0
    %1316 = vmatprep.subr.mxu0 0.0
    %1317 = vmatpush2.msra.mxu0 0.0
    %1318 = vmatprep.subr.mxu0 0.0
    %1319 = vmatpush2.msra.mxu0 0.0
    %1320 = vmatprep.subr.mxu0 0.0
    %1321 = vmatpush2.msra.mxu0 0.0
    %1322 = vmatprep.subr.mxu0 0.0
    %1323 = vmatpush2.msra.mxu0 0.0
    %1324 = vmatprep.mubr.f32.mxu0 0.0
    %1325 = vmatmul.mubr.f32.gmra.mxu0 %v1256
    %v1326 = vpop.f32.mrf.mxu0
    %v1327 = vadd.f32 %v1217, %v1326
    %v1328 = vpop.f32.mrf.mxu0
    %1329 = vmatprep.mubr.f32.mxu0 0.0
    %1330 = vmatmul.mubr.f32.gmra.mxu0 %v1258
    %v1331 = vpop.f32.mrf.mxu0
    %v1332 = vadd.f32 %v1217, %v1331
    %v1333 = vpop.f32.mrf.mxu0
    %1334 = vdwg.mxu0
    %v1335 = vld [vmem:[%s7] sm:$0x1]
    %v1337 = vlaneseq
    %v1338 = vshrl.u32 %v1337, 7
    %v1339 = vsub.s32 0, %v1338
    %v1340 = vrot.slane %v1335, %v1339
    %v1342 = vmul.f32 %v1327, %v1340
    %v1343 = vmul.f32 %v1332, %v1340
    %v1344 = vsel %vm94, %v1342, 0.0
    %1345 = vadd.xlane.f32.xlu0 %v1344
    %v1346 = vpop.xlane.xlu0 %1345
    %v1347 = vsel %vm94, %v1343, 0.0
    %1348 = vadd.xlane.f32.xlu0 %v1347
    %v1349 = vpop.xlane.xlu0 %1348
    %s1350 = sld [smem:[#allocation2]]
    %v1351 = vstv %s1350
    %v1352 = vadd.f32 %v1346, %v1351
    %v1353 = vadd.f32 %v1349, %v1351
    %v1354 = vrot.slane %v1352, 4
    %v1355 = vmax.f32 %v1352, %v1354
    %v1356 = vrot.slane %v1355, 2
    %v1357 = vmax.f32 %v1355, %v1356
    %v1358 = vrot.slane %v1357, 1
    %v1359 = vmax.f32 %v1357, %v1358
    %v1360 = vrot.slane %v1353, 4
    %v1361 = vmax.f32 %v1353, %v1360
    %v1362 = vrot.slane %v1361, 2
    %v1363 = vmax.f32 %v1361, %v1362
    %v1364 = vrot.slane %v1363, 1
    %v1365 = vmax.f32 %v1363, %v1364
    %v1366 = vsub.f32 %v1352, %v1359
    %v1367 = vsub.f32 %v1353, %v1365
    %v1368 = vmul.f32 %v1366, 1.442695
    %v1369 = vpow.pop %v1368
    %v1370 = vmul.f32 %v1367, 1.442695
    %v1371 = vpow.pop %v1370
    %v1372 = vrot.slane %v1369, 4
    %v1373 = vadd.f32 %v1369, %v1372
    %v1374 = vrot.slane %v1373, 2
    %v1375 = vadd.f32 %v1373, %v1374
    %v1376 = vrot.slane %v1375, 1
    %v1377 = vadd.f32 %v1375, %v1376
    %v1378 = vrot.slane %v1371, 4
    %v1379 = vadd.f32 %v1371, %v1378
    %v1380 = vrot.slane %v1379, 2
    %v1381 = vadd.f32 %v1379, %v1380
    %v1382 = vrot.slane %v1381, 1
    %v1383 = vadd.f32 %v1381, %v1382
    %v1384 = vrcp.pop %v1377
    %v1385 = vmul.f32 %v1369, %v1384
    %v1386 = vrcp.pop %v1383
    %v1387 = vmul.f32 %v1371, %v1386
    %v1388 = vmul.f32 %v1327, %v1385
    %v1389 = vmul.f32 %v1332, %v1387
    %v1390 = vsel %vm94, %v1388, 0.0
    %v1391 = vrot.slane %v1390, 4
    %v1392 = vadd.f32 %v1390, %v1391
    %v1393 = vrot.slane %v1392, 2
    %v1394 = vadd.f32 %v1392, %v1393
    %v1395 = vrot.slane %v1394, 1
    %v1396 = vadd.f32 %v1394, %v1395
    %v1397 = vsel %vm94, %v1389, 0.0
    %v1398 = vrot.slane %v1397, 4
    %v1399 = vadd.f32 %v1397, %v1398
    %v1400 = vrot.slane %v1399, 2
    %v1401 = vadd.f32 %v1399, %v1400
    %v1402 = vrot.slane %v1401, 1
    %v1403 = vadd.f32 %v1401, %v1402
    %v1404 = vld [vmem:[#allocation8] sm:$0xff]
    %v1405 = vld [vmem:[#allocation8 + $0x8] sm:$0xff]
    %v1406 = vld [vmem:[#allocation8 + $0x10] sm:$0xff]
    %v1407 = vld [vmem:[#allocation8 + $0x18] sm:$0xff]
    %v1408 = vld [vmem:[%s10] sm:$0x1]
    %v1410 = vlaneseq
    %v1411 = vshrl.u32 %v1410, 7
    %v1412 = vsub.s32 0, %v1411
    %v1413 = vrot.slane %v1408, %v1412
    %v1417 = vsel %vm1235, %v1403, %v1396
    %v1418 = vsel %vm94, %v1417, 0
    %1420 = vmatprep.subr.mxu0 0.0
    %1421 = vmatpush1.msra.mxu0 0.0
    %1422 = vmatprep.subr.mxu0 0.0
    %1423 = vmatpush1.msra.mxu0 0.0
    %1424 = vmatprep.subr.mxu0 0.0
    %1425 = vmatpush1.msra.mxu0 0.0
    %1426 = vmatprep.subr.mxu0 0.0
    %1427 = vmatpush1.msra.mxu0 0.0
    %1428 = vmatprep.subr.mxu0 0.0
    %1429 = vmatpush1.msra.mxu0 0.0
    %1430 = vmatprep.subr.mxu0 0.0
    %1431 = vmatpush1.msra.mxu0 0.0
    %1432 = vmatprep.subr.mxu0 0.0
    %1433 = vmatpush1.msra.mxu0 0.0
    %1434 = vmatprep.subr.mxu0 0.0
    %1435 = vmatpush1.msra.mxu0 0.0
    %1436 = vmatprep.subr.mxu0 0.0
    %1437 = vmatpush1.msra.mxu0 0.0
    %1438 = vmatprep.subr.mxu0 0.0
    %1439 = vmatpush1.msra.mxu0 0.0
    %1440 = vmatprep.subr.mxu0 0.0
    %1441 = vmatpush1.msra.mxu0 0.0
    %1442 = vmatprep.subr.mxu0 0.0
    %1443 = vmatpush1.msra.mxu0 0.0
    %1444 = vmatprep.subr.mxu0 0.0
    %1445 = vmatpush1.msra.mxu0 %v1407
    %1446 = vmatprep.subr.mxu0 0.0
    %1447 = vmatpush1.msra.mxu0 %v1406
    %1448 = vmatprep.subr.mxu0 0.0
    %1449 = vmatpush1.msra.mxu0 %v1405
    %1450 = vmatprep.subr.mxu0 0.0
    %1451 = vmatpush1.msra.mxu0 %v1404
    %1452 = vmatprep.subr.mxu0 0.0
    %1453 = vmatpush2.msra.mxu0 0.0
    %1454 = vmatprep.subr.mxu0 0.0
    %1455 = vmatpush2.msra.mxu0 0.0
    %1456 = vmatprep.subr.mxu0 0.0
    %1457 = vmatpush2.msra.mxu0 0.0
    %1458 = vmatprep.subr.mxu0 0.0
    %1459 = vmatpush2.msra.mxu0 0.0
    %1460 = vmatprep.subr.mxu0 0.0
    %1461 = vmatpush2.msra.mxu0 0.0
    %1462 = vmatprep.subr.mxu0 0.0
    %1463 = vmatpush2.msra.mxu0 0.0
    %1464 = vmatprep.subr.mxu0 0.0
    %1465 = vmatpush2.msra.mxu0 0.0
    %1466 = vmatprep.subr.mxu0 0.0
    %1467 = vmatpush2.msra.mxu0 0.0
    %1468 = vmatprep.subr.mxu0 0.0
    %1469 = vmatpush2.msra.mxu0 0.0
    %1470 = vmatprep.subr.mxu0 0.0
    %1471 = vmatpush2.msra.mxu0 0.0
    %1472 = vmatprep.subr.mxu0 0.0
    %1473 = vmatpush2.msra.mxu0 0.0
    %1474 = vmatprep.subr.mxu0 0.0
    %1475 = vmatpush2.msra.mxu0 0.0
    %1476 = vmatprep.subr.mxu0 0.0
    %1477 = vmatpush2.msra.mxu0 0.0
    %1478 = vmatprep.subr.mxu0 0.0
    %1479 = vmatpush2.msra.mxu0 0.0
    %1480 = vmatprep.subr.mxu0 0.0
    %1481 = vmatpush2.msra.mxu0 0.0
    %1482 = vmatprep.subr.mxu0 0.0
    %1483 = vmatpush2.msra.mxu0 0.0
    %1484 = vmatprep.mubr.f32.mxu0 0.0
    %1485 = vmatmul.mubr.f32.gmra.mxu0 %v1418
    %v1486 = vpop.f32.mrf.mxu0
    %v1487 = vadd.f32 %v1413, %v1486
    %v1488 = vpop.f32.mrf.mxu0
    %1489 = vdwg.mxu0
    %1490 = vst [vmem:[#allocation9] sm:$0x3] %v1487
    // Predicated region
    $region58: #{tpu_custom_call.1} parent=1 // pred_check
      _
    $region59: #{tpu_custom_call.1} parent=1 // pred_check_branch
      %1492 = sbr.rel (0) target = $region61
    $region60: #{tpu_custom_call.1} parent=1 // pred_region
      %s1494 = ssub.s32 32, 32
      %1495 = vsyncadd [#allocation5], %s1494
      %s1497 = sshll.u32 [#allocation9], 4
      %s1498 = int_to_ptr.vmem [resolvable:$true] %s1497
      %1500 = dma.vmem_to_hbm [thread:$0]  %s1498, 32, %s11, [#allocation5]
    $region61: #{tpu_custom_call.1} parent=1 // pred_fallthru
      _
    // Predicated region
    $region62: #{tpu_custom_call.1} parent=1 // pred_check
      _
    $region63: #{tpu_custom_call.1} parent=1 // pred_check_branch
      %1502 = sbr.rel (0) target = $region65
    $region64: #{tpu_custom_call.1} parent=1 // pred_region
      %1503 = dma.done [#allocation5], 32
    $region65: #{tpu_custom_call.1} parent=1 // pred_fallthru
      _
    %1504 = vsyncpa [#allocation4], 1
    %1505 = vsyncpa [#allocation7], 1
    %1506 = vsyncpa [#allocation5], 1

</llo_original>
